<compile_context>
chip_gen: v7x
topology: tpu7x:2x2x1
jax: 0.10.0
libtpu: 0.0.40
codegen_flags: <defaults>
</compile_context>

<pallas_src>
import functools

import jax
import jax.numpy as jnp
from jax.experimental import pallas as pl
from jax.experimental.pallas import tpu as pltpu

LN_EPS = 1e-5
NEG_INF = -1e30  # finite "-inf": exp underflows to exactly 0, diagonal always unmasked


def _layernorm(x, gamma, beta):
    mean = jnp.mean(x, axis=-1, keepdims=True)
    var = jnp.mean((x - mean) ** 2, axis=-1, keepdims=True)
    return (x - mean) * jax.lax.rsqrt(var + LN_EPS) * gamma + beta


# ----------------------------------------------------------------------------
# Fused kernel: one program = one (T, C) batch slab.
#   y1 = x  + proj( causal_MHA( LN1(x) ) )
#   y  = y1 + W2 @ relu( LN2(y1) @ W1 + b1 ) + b2
# ----------------------------------------------------------------------------
def block_kernel(x_ref, g1_ref, b1_ref, wqkv_ref, wp_ref, bp_ref,
                 g2_ref, b2_ref, w1_ref, bb1_ref, w2_ref, bb2_ref, y_ref,
                 *, n_head, compute_dtype):
    x = x_ref[0]                                            # (T, C) f32
    T, C = x.shape
    H = n_head
    hs = C // H
    cd = compute_dtype

    # ---------------- LN1 -> fused QKV matmul ----------------
    xn = _layernorm(x, g1_ref[0], b1_ref[0])
    # Single lane-dense matmul; n_embd**-0.5 already folded into the Q columns.
    qkv = jnp.dot(xn.astype(cd), wqkv_ref[...],
                  preferred_element_type=cd)                # (T, 3C) compute dtype

    # Split heads: static lane slices + relayout (T, C) -> (H, T, hs).
    def to_heads(m):
        return jnp.transpose(m.reshape(T, H, hs), (1, 0, 2))

    qh = to_heads(qkv[:, :C])                               # (H, T, hs)
    kh = to_heads(qkv[:, C:2 * C])                          # (H, T, hs)
    vh = to_heads(qkv[:, 2 * C:])                           # (H, T, hs)

    # ---------------- causal attention, deferred softmax normalization ----------------
    wei = jnp.einsum('hqd,hkd->hqk', qh, kh,
                     preferred_element_type=jnp.float32)    # (H, T, T) f32
    row = jax.lax.broadcasted_iota(jnp.int32, (T, T), 0)
    col = jax.lax.broadcasted_iota(jnp.int32, (T, T), 1)
    wei = jnp.where((col <= row)[None], wei, NEG_INF)       # single (T,T) mask, broadcast
    wei = wei - jnp.max(wei, axis=-1, keepdims=True)
    p = jnp.exp(wei)                                        # unnormalized probs
    rowsum = jnp.sum(p, axis=-1, keepdims=True)             # (H, T, 1) f32
    # attention-weight dropout: identity in eval mode

    att = jnp.einsum('hqk,hkd->hqd', p.astype(cd), vh,
                     preferred_element_type=jnp.float32)    # (H, T, hs) f32
    # deferred softmax divide on the small (H,T,hs) tensor (EUP reciprocal)
    att = att * pl.reciprocal(rowsum, approx=True)

    # Relayout heads back to a lane-dense (T, C) slab, then ONE proj matmul.
    att_flat = jnp.transpose(att, (1, 0, 2)).reshape(T, C)
    sa = jnp.dot(att_flat.astype(cd), wp_ref[...],
                 preferred_element_type=jnp.float32) + bp_ref[0]
    y1 = x + sa                                             # proj dropout = id

    # ---------------- LN2 -> MLP (ReLU) -> residual ----------------
    yn = _layernorm(y1, g2_ref[0], b2_ref[0])
    h1 = jnp.dot(yn.astype(cd), w1_ref[...],
                 preferred_element_type=jnp.float32) + bb1_ref[0]
    h1 = jnp.maximum(h1, 0.0)
    out = jnp.dot(h1.astype(cd), w2_ref[...],
                  preferred_element_type=jnp.float32) + bb2_ref[0]
    y_ref[0] = y1 + out                                     # FFN dropout = id


def block_forward(x, params, *, compute_dtype=jnp.float32):
    B, T, C = x.shape
    (g1, b1, wq, wk, wv, wp, bp, g2, b2, w1, bb1, w2, bb2) = params
    H, _, hs = wq.shape
    hidden = w1.shape[1]

    # Host-side weight prep (free):
    #  * pack Q/K/V into one (C, 3C) matrix; column order inside each block is
    #    head-major so head h lives in lanes [h*hs:(h+1)*hs],
    #  * fold the n_embd**-0.5 attention scale into the Q block,
    #  * store matmul weights in compute_dtype (bf16 halves DMA + VMEM bytes).
    head_major = lambda w: jnp.transpose(w, (1, 0, 2)).reshape(C, C)
    wqkv = jnp.concatenate(
        [head_major(wq) * (C ** -0.5), head_major(wk), head_major(wv)],
        axis=1).astype(compute_dtype)                        # (C, 3C)
    wp_c = wp.astype(compute_dtype)
    w1_c = w1.astype(compute_dtype)
    w2_c = w2.astype(compute_dtype)

    full2 = lambda shape: pl.BlockSpec(shape, lambda b: (0, 0))
    act_spec = pl.BlockSpec((1, T, C), lambda b: (b, 0, 0))

    wbytes = jnp.dtype(compute_dtype).itemsize
    cost = pl.CostEstimate(
        flops=B * (24 * T * C * C + 4 * T * T * C),
        transcendentals=B * H * T * T,
        bytes_accessed=int(4 * 2 * B * T * C + wbytes * 12 * C * C + 4 * 10 * C),
    )

    kernel = functools.partial(block_kernel, n_head=H, compute_dtype=compute_dtype)

    return pl.pallas_call(
        kernel,
        out_shape=jax.ShapeDtypeStruct((B, T, C), jnp.float32),
        grid=(B,),
        in_specs=[
            act_spec,                                   # x
            full2((1, C)), full2((1, C)),               # ln1 gamma / beta
            full2((C, 3 * C)),                          # packed Wqkv (scale folded)
            full2((C, C)), full2((1, C)),               # Wproj, bproj
            full2((1, C)), full2((1, C)),               # ln2 gamma / beta
            full2((C, hidden)), full2((1, hidden)),     # W1, b1
            full2((hidden, C)), full2((1, C)),          # W2, b2
        ],
        out_specs=act_spec,
        compiler_params=pltpu.CompilerParams(
            dimension_semantics=("parallel",),
            vmem_limit_bytes=32 * 1024 * 1024),
        cost_estimate=cost,
    )(x, g1, b1, wqkv, wp_c, bp, g2, b2, w1_c, bb1, w2_c, bb2)


# ----------------------------------------------------------------------------
# Pure-JAX reference (mirrors the PyTorch module exactly) for correctness.
# ----------------------------------------------------------------------------
def ref_block(x, params):
    (g1, b1, wq, wk, wv, wp, bp, g2, b2, w1, bb1, w2, bb2) = params
    B, T, C = x.shape
    H = wq.shape[0]

    def ln(v, g, b):
        m = jnp.mean(v, axis=-1, keepdims=True)
        s = jnp.mean((v - m) ** 2, axis=-1, keepdims=True)
        return (v - m) / jnp.sqrt(s + LN_EPS) * g + b

    xn = ln(x, g1[0], b1[0])
    tril = jnp.tril(jnp.ones((T, T)))
    heads = []
    for h in range(H):
        q = xn @ wq[h]
        k = xn @ wk[h]
        v = xn @ wv[h]
        wei = q @ jnp.swapaxes(k, -1, -2) * C ** (-0.5)
        wei = jnp.where(tril == 0, -jnp.inf, wei)
        wei = jax.nn.softmax(wei, axis=-1)
        heads.append(wei @ v)
    sa = jnp.concatenate(heads, axis=-1) @ wp + bp[0]
    x = x + sa
    xn2 = ln(x, g2[0], b2[0])
    ff = jax.nn.relu(xn2 @ w1 + bb1[0]) @ w2 + bb2[0]
    return x + ff


if __name__ == "__main__":
    # Small config consistent with the module structure: n_embd divisible by
    # n_head, and the true head_size (64) of the real module (384/6) preserved.
    B, T, C, H = 2, 16, 128, 2
    hs = C // H
    hidden = 4 * C

    key = jax.random.PRNGKey(0)
    keys = jax.random.split(key, 10)
    scale = 0.02

    x = jax.random.normal(keys[0], (B, T, C), dtype=jnp.float32)

    g1 = jnp.ones((1, C), jnp.float32)
    b1 = jnp.zeros((1, C), jnp.float32)
    g2 = jnp.ones((1, C), jnp.float32)
    b2 = jnp.zeros((1, C), jnp.float32)
    wq = scale * jax.random.normal(keys[1], (H, C, hs), dtype=jnp.float32)
    wk = scale * jax.random.normal(keys[2], (H, C, hs), dtype=jnp.float32)
    wv = scale * jax.random.normal(keys[3], (H, C, hs), dtype=jnp.float32)
    wp = scale * jax.random.normal(keys[4], (C, C), dtype=jnp.float32)
    bp = scale * jax.random.normal(keys[5], (1, C), dtype=jnp.float32)
    w1 = scale * jax.random.normal(keys[6], (C, hidden), dtype=jnp.float32)
    bb1 = scale * jax.random.normal(keys[7], (1, hidden), dtype=jnp.float32)
    w2 = scale * jax.random.normal(keys[8], (hidden, C), dtype=jnp.float32)
    bb2 = scale * jax.random.normal(keys[9], (1, C), dtype=jnp.float32)

    params = (g1, b1, wq, wk, wv, wp, bp, g2, b2, w1, bb1, w2, bb2)

    expected = ref_block(x, params)

    # f32 compute path (tight tolerance).
    out = jax.block_until_ready(block_forward(x, params))
    assert out.shape == (B, T, C) and out.dtype == jnp.float32
    err = float(jnp.max(jnp.abs(out - expected)))
    assert jnp.allclose(out, expected, rtol=5e-4, atol=5e-4), err

    # bf16 matmul operands, f32 accumulation (looser tolerance).
    out_bf = jax.block_until_ready(
        block_forward(x, params, compute_dtype=jnp.bfloat16))
    err_bf = float(jnp.max(jnp.abs(out_bf - expected)))
    assert jnp.allclose(out_bf, expected, rtol=2.5e-2, atol=2.5e-2), err_bf

    print("KERNEL_OK")
</pallas_src>

<mosaic_0001>
module attributes {stable_mosaic.version = 11 : i64} {
  func.func @block_kernel(%arg0: i32, %arg1: memref<1x16x128xf32, #tpu.memory_space<vmem>>, %arg2: memref<1x128xf32, #tpu.memory_space<vmem>>, %arg3: memref<1x128xf32, #tpu.memory_space<vmem>>, %arg4: memref<128x384xf32, #tpu.memory_space<vmem>>, %arg5: memref<128x128xf32, #tpu.memory_space<vmem>>, %arg6: memref<1x128xf32, #tpu.memory_space<vmem>>, %arg7: memref<1x128xf32, #tpu.memory_space<vmem>>, %arg8: memref<1x128xf32, #tpu.memory_space<vmem>>, %arg9: memref<128x512xf32, #tpu.memory_space<vmem>>, %arg10: memref<1x512xf32, #tpu.memory_space<vmem>>, %arg11: memref<512x128xf32, #tpu.memory_space<vmem>>, %arg12: memref<1x128xf32, #tpu.memory_space<vmem>>, %arg13: memref<1x16x128xf32, #tpu.memory_space<vmem>>) attributes {dimension_semantics = [#tpu.dimension_semantics<parallel>], iteration_bounds = array<i64: 2>, scalar_prefetch = 0 : i64, scratch_operands = 0 : i64, tpu.core_type = #tpu.core_type<tc>, window_params = [{transform_indices = @transform_0, window_bounds = array<i64: 1, 16, 128>}, {pipeline_mode = #tpu.pipeline_mode<synchronous>, transform_indices = @transform_1, window_bounds = array<i64: 1, 128>}, {pipeline_mode = #tpu.pipeline_mode<synchronous>, transform_indices = @transform_2, window_bounds = array<i64: 1, 128>}, {pipeline_mode = #tpu.pipeline_mode<synchronous>, transform_indices = @transform_3, window_bounds = array<i64: 128, 384>}, {pipeline_mode = #tpu.pipeline_mode<synchronous>, transform_indices = @transform_4, window_bounds = array<i64: 128, 128>}, {pipeline_mode = #tpu.pipeline_mode<synchronous>, transform_indices = @transform_5, window_bounds = array<i64: 1, 128>}, {pipeline_mode = #tpu.pipeline_mode<synchronous>, transform_indices = @transform_6, window_bounds = array<i64: 1, 128>}, {pipeline_mode = #tpu.pipeline_mode<synchronous>, transform_indices = @transform_7, window_bounds = array<i64: 1, 128>}, {pipeline_mode = #tpu.pipeline_mode<synchronous>, transform_indices = @transform_8, window_bounds = array<i64: 128, 512>}, {pipeline_mode = #tpu.pipeline_mode<synchronous>, transform_indices = @transform_9, window_bounds = array<i64: 1, 512>}, {pipeline_mode = #tpu.pipeline_mode<synchronous>, transform_indices = @transform_10, window_bounds = array<i64: 512, 128>}, {pipeline_mode = #tpu.pipeline_mode<synchronous>, transform_indices = @transform_11, window_bounds = array<i64: 1, 128>}, {transform_indices = @transform_12, window_bounds = array<i64: 1, 16, 128>}]} {
    %c0 = arith.constant 0 : index
    %c0_0 = arith.constant 0 : index
    %c0_1 = arith.constant 0 : index
    %0 = vector.load %arg1[%c0, %c0_0, %c0_1] : memref<1x16x128xf32, #tpu.memory_space<vmem>>, vector<1x16x128xf32>
    %1 = vector.shape_cast %0 : vector<1x16x128xf32> to vector<16x128xf32>
    %c0_2 = arith.constant 0 : index
    %c0_3 = arith.constant 0 : index
    %2 = vector.load %arg2[%c0_2, %c0_3] : memref<1x128xf32, #tpu.memory_space<vmem>>, vector<1x128xf32>
    %3 = vector.shape_cast %2 : vector<1x128xf32> to vector<128xf32>
    %c0_4 = arith.constant 0 : index
    %c0_5 = arith.constant 0 : index
    %4 = vector.load %arg3[%c0_4, %c0_5] : memref<1x128xf32, #tpu.memory_space<vmem>>, vector<1x128xf32>
    %5 = vector.shape_cast %4 : vector<1x128xf32> to vector<128xf32>
    %cst = arith.constant dense<0.000000e+00> : vector<16xf32>
    %6 = vector.multi_reduction <add>, %1, %cst [1] : vector<16x128xf32> to vector<16xf32>
    %7 = vector.shape_cast %6 : vector<16xf32> to vector<16x1xf32>
    %cst_6 = arith.constant 1.280000e+02 : f32
    %8 = vector.broadcast %cst_6 : f32 to vector<16x1xf32>
    %9 = arith.divf %7, %8 : vector<16x1xf32>
    %10 = vector.broadcast %9 : vector<16x1xf32> to vector<16x128xf32>
    %11 = arith.subf %1, %10 : vector<16x128xf32>
    %12 = arith.mulf %11, %11 : vector<16x128xf32>
    %cst_7 = arith.constant dense<0.000000e+00> : vector<16xf32>
    %13 = vector.multi_reduction <add>, %12, %cst_7 [1] : vector<16x128xf32> to vector<16xf32>
    %14 = vector.shape_cast %13 : vector<16xf32> to vector<16x1xf32>
    %cst_8 = arith.constant 1.280000e+02 : f32
    %15 = vector.broadcast %cst_8 : f32 to vector<16x1xf32>
    %16 = arith.divf %14, %15 : vector<16x1xf32>
    %17 = vector.broadcast %9 : vector<16x1xf32> to vector<16x128xf32>
    %18 = arith.subf %1, %17 : vector<16x128xf32>
    %cst_9 = arith.constant 9.99999974E-6 : f32
    %19 = vector.broadcast %cst_9 : f32 to vector<16x1xf32>
    %20 = arith.addf %16, %19 : vector<16x1xf32>
    %21 = math.rsqrt %20 : vector<16x1xf32>
    %22 = vector.broadcast %21 : vector<16x1xf32> to vector<16x128xf32>
    %23 = arith.mulf %18, %22 : vector<16x128xf32>
    %24 = vector.shape_cast %3 : vector<128xf32> to vector<1x128xf32>
    %25 = vector.broadcast %24 : vector<1x128xf32> to vector<16x128xf32>
    %26 = arith.mulf %23, %25 : vector<16x128xf32>
    %27 = vector.shape_cast %5 : vector<128xf32> to vector<1x128xf32>
    %28 = vector.broadcast %27 : vector<1x128xf32> to vector<16x128xf32>
    %29 = arith.addf %26, %28 : vector<16x128xf32>
    %c0_10 = arith.constant 0 : index
    %c0_11 = arith.constant 0 : index
    %30 = vector.load %arg4[%c0_10, %c0_11] : memref<128x384xf32, #tpu.memory_space<vmem>>, vector<128x384xf32>
    %cst_12 = arith.constant dense<0.000000e+00> : vector<16x384xf32>
    %31 = tpu.matmul %29, %30, %cst_12 {dimension_numbers = #tpu.dot_dimension_numbers<[1], [0], [0], [1], [0, 0, 1, 1], [], []>} : vector<16x128xf32>, vector<128x384xf32>, vector<16x384xf32> -> vector<16x384xf32>
    %32 = vector.extract_strided_slice %31 {offsets = [0, 0], sizes = [16, 128], strides = [1, 1]} : vector<16x384xf32> to vector<16x128xf32>
    %33 = vector.shape_cast %32 : vector<16x128xf32> to vector<16x2x64xf32>
    %34 = tpu.transpose %33, [1, 0, 2] : vector<16x2x64xf32> -> vector<2x16x64xf32>
    %35 = vector.extract_strided_slice %31 {offsets = [0, 128], sizes = [16, 128], strides = [1, 1]} : vector<16x384xf32> to vector<16x128xf32>
    %36 = vector.shape_cast %35 : vector<16x128xf32> to vector<16x2x64xf32>
    %37 = tpu.transpose %36, [1, 0, 2] : vector<16x2x64xf32> -> vector<2x16x64xf32>
    %38 = vector.extract_strided_slice %31 {offsets = [0, 256], sizes = [16, 128], strides = [1, 1]} : vector<16x384xf32> to vector<16x128xf32>
    %39 = vector.shape_cast %38 : vector<16x128xf32> to vector<16x2x64xf32>
    %40 = tpu.transpose %39, [1, 0, 2] : vector<16x2x64xf32> -> vector<2x16x64xf32>
    "tpu.trace_start"() <{level = 10 : i32, message = "hqd,hkd->hqk"}> : () -> ()
    %cst_13 = arith.constant dense<0.000000e+00> : vector<2x16x16xf32>
    %41 = tpu.matmul %34, %37, %cst_13 {dimension_numbers = #tpu.dot_dimension_numbers<[2], [2], [1], [1], [0, 0, 0, 1, 1, 1], [0], [0]>} : vector<2x16x64xf32>, vector<2x16x64xf32>, vector<2x16x16xf32> -> vector<2x16x16xf32>
    "tpu.trace_stop"() : () -> ()
    %42 = tpu.iota {dimensions = array<i32: 0>} : vector<16x16xi32>
    %43 = tpu.iota {dimensions = array<i32: 1>} : vector<16x16xi32>
    %44 = arith.cmpi sle, %43, %42 : vector<16x16xi32>
    %45 = vector.shape_cast %44 : vector<16x16xi1> to vector<1x16x16xi1>
    %cst_14 = arith.constant -1.000000e+30 : f32
    %46 = vector.shape_cast %45 : vector<1x16x16xi1> to vector<1x16x16xi1>
    %47 = vector.broadcast %46 : vector<1x16x16xi1> to vector<2x16x16xi1>
    %48 = vector.broadcast %cst_14 : f32 to vector<2x16x16xf32>
    %49 = arith.select %47, %41, %48 : vector<2x16x16xi1>, vector<2x16x16xf32>
    %cst_15 = arith.constant dense<0xFF800000> : vector<2x16xf32>
    %50 = vector.multi_reduction <maximumf>, %49, %cst_15 [2] : vector<2x16x16xf32> to vector<2x16xf32>
    %51 = vector.shape_cast %50 : vector<2x16xf32> to vector<2x16x1xf32>
    %52 = vector.broadcast %51 : vector<2x16x1xf32> to vector<2x16x16xf32>
    %53 = arith.subf %49, %52 : vector<2x16x16xf32>
    %54 = math.exp %53 : vector<2x16x16xf32>
    %cst_16 = arith.constant dense<0.000000e+00> : vector<2x16xf32>
    %55 = vector.multi_reduction <add>, %54, %cst_16 [2] : vector<2x16x16xf32> to vector<2x16xf32>
    %56 = vector.shape_cast %55 : vector<2x16xf32> to vector<2x16x1xf32>
    "tpu.trace_start"() <{level = 10 : i32, message = "hqk,hkd->hqd"}> : () -> ()
    %cst_17 = arith.constant dense<0.000000e+00> : vector<2x16x64xf32>
    %57 = tpu.matmul %54, %40, %cst_17 {dimension_numbers = #tpu.dot_dimension_numbers<[2], [1], [1], [2], [0, 0, 0, 1, 1, 2], [0], [0]>} : vector<2x16x16xf32>, vector<2x16x64xf32>, vector<2x16x64xf32> -> vector<2x16x64xf32>
    "tpu.trace_stop"() : () -> ()
    %58 = tpu.reciprocal %56 {approx = true} : vector<2x16x1xf32> -> vector<2x16x1xf32>
    %59 = vector.broadcast %58 : vector<2x16x1xf32> to vector<2x16x64xf32>
    %60 = arith.mulf %57, %59 : vector<2x16x64xf32>
    %61 = tpu.transpose %60, [1, 0, 2] : vector<2x16x64xf32> -> vector<16x2x64xf32>
    %62 = vector.shape_cast %61 : vector<16x2x64xf32> to vector<16x128xf32>
    %c0_18 = arith.constant 0 : index
    %c0_19 = arith.constant 0 : index
    %63 = vector.load %arg5[%c0_18, %c0_19] : memref<128x128xf32, #tpu.memory_space<vmem>>, vector<128x128xf32>
    %cst_20 = arith.constant dense<0.000000e+00> : vector<16x128xf32>
    %64 = tpu.matmul %62, %63, %cst_20 {dimension_numbers = #tpu.dot_dimension_numbers<[1], [0], [0], [1], [0, 0, 1, 1], [], []>} : vector<16x128xf32>, vector<128x128xf32>, vector<16x128xf32> -> vector<16x128xf32>
    %c0_21 = arith.constant 0 : index
    %c0_22 = arith.constant 0 : index
    %65 = vector.load %arg6[%c0_21, %c0_22] : memref<1x128xf32, #tpu.memory_space<vmem>>, vector<1x128xf32>
    %66 = vector.shape_cast %65 : vector<1x128xf32> to vector<128xf32>
    %67 = vector.shape_cast %66 : vector<128xf32> to vector<1x128xf32>
    %68 = vector.broadcast %67 : vector<1x128xf32> to vector<16x128xf32>
    %69 = arith.addf %64, %68 : vector<16x128xf32>
    %70 = arith.addf %1, %69 : vector<16x128xf32>
    %c0_23 = arith.constant 0 : index
    %c0_24 = arith.constant 0 : index
    %71 = vector.load %arg7[%c0_23, %c0_24] : memref<1x128xf32, #tpu.memory_space<vmem>>, vector<1x128xf32>
    %72 = vector.shape_cast %71 : vector<1x128xf32> to vector<128xf32>
    %c0_25 = arith.constant 0 : index
    %c0_26 = arith.constant 0 : index
    %73 = vector.load %arg8[%c0_25, %c0_26] : memref<1x128xf32, #tpu.memory_space<vmem>>, vector<1x128xf32>
    %74 = vector.shape_cast %73 : vector<1x128xf32> to vector<128xf32>
    %cst_27 = arith.constant dense<0.000000e+00> : vector<16xf32>
    %75 = vector.multi_reduction <add>, %70, %cst_27 [1] : vector<16x128xf32> to vector<16xf32>
    %76 = vector.shape_cast %75 : vector<16xf32> to vector<16x1xf32>
    %cst_28 = arith.constant 1.280000e+02 : f32
    %77 = vector.broadcast %cst_28 : f32 to vector<16x1xf32>
    %78 = arith.divf %76, %77 : vector<16x1xf32>
    %79 = vector.broadcast %78 : vector<16x1xf32> to vector<16x128xf32>
    %80 = arith.subf %70, %79 : vector<16x128xf32>
    %81 = arith.mulf %80, %80 : vector<16x128xf32>
    %cst_29 = arith.constant dense<0.000000e+00> : vector<16xf32>
    %82 = vector.multi_reduction <add>, %81, %cst_29 [1] : vector<16x128xf32> to vector<16xf32>
    %83 = vector.shape_cast %82 : vector<16xf32> to vector<16x1xf32>
    %cst_30 = arith.constant 1.280000e+02 : f32
    %84 = vector.broadcast %cst_30 : f32 to vector<16x1xf32>
    %85 = arith.divf %83, %84 : vector<16x1xf32>
    %86 = vector.broadcast %78 : vector<16x1xf32> to vector<16x128xf32>
    %87 = arith.subf %70, %86 : vector<16x128xf32>
    %cst_31 = arith.constant 9.99999974E-6 : f32
    %88 = vector.broadcast %cst_31 : f32 to vector<16x1xf32>
    %89 = arith.addf %85, %88 : vector<16x1xf32>
    %90 = math.rsqrt %89 : vector<16x1xf32>
    %91 = vector.broadcast %90 : vector<16x1xf32> to vector<16x128xf32>
    %92 = arith.mulf %87, %91 : vector<16x128xf32>
    %93 = vector.shape_cast %72 : vector<128xf32> to vector<1x128xf32>
    %94 = vector.broadcast %93 : vector<1x128xf32> to vector<16x128xf32>
    %95 = arith.mulf %92, %94 : vector<16x128xf32>
    %96 = vector.shape_cast %74 : vector<128xf32> to vector<1x128xf32>
    %97 = vector.broadcast %96 : vector<1x128xf32> to vector<16x128xf32>
    %98 = arith.addf %95, %97 : vector<16x128xf32>
    %c0_32 = arith.constant 0 : index
    %c0_33 = arith.constant 0 : index
    %99 = vector.load %arg9[%c0_32, %c0_33] : memref<128x512xf32, #tpu.memory_space<vmem>>, vector<128x512xf32>
    %cst_34 = arith.constant dense<0.000000e+00> : vector<16x512xf32>
    %100 = tpu.matmul %98, %99, %cst_34 {dimension_numbers = #tpu.dot_dimension_numbers<[1], [0], [0], [1], [0, 0, 1, 1], [], []>} : vector<16x128xf32>, vector<128x512xf32>, vector<16x512xf32> -> vector<16x512xf32>
    %c0_35 = arith.constant 0 : index
    %c0_36 = arith.constant 0 : index
    %101 = vector.load %arg10[%c0_35, %c0_36] : memref<1x512xf32, #tpu.memory_space<vmem>>, vector<1x512xf32>
    %102 = vector.shape_cast %101 : vector<1x512xf32> to vector<512xf32>
    %103 = vector.shape_cast %102 : vector<512xf32> to vector<1x512xf32>
    %104 = vector.broadcast %103 : vector<1x512xf32> to vector<16x512xf32>
    %105 = arith.addf %100, %104 : vector<16x512xf32>
    %cst_37 = arith.constant 0.000000e+00 : f32
    %106 = vector.broadcast %cst_37 : f32 to vector<16x512xf32>
    %107 = arith.maximumf %105, %106 : vector<16x512xf32>
    %c0_38 = arith.constant 0 : index
    %c0_39 = arith.constant 0 : index
    %108 = vector.load %arg11[%c0_38, %c0_39] : memref<512x128xf32, #tpu.memory_space<vmem>>, vector<512x128xf32>
    %cst_40 = arith.constant dense<0.000000e+00> : vector<16x128xf32>
    %109 = tpu.matmul %107, %108, %cst_40 {dimension_numbers = #tpu.dot_dimension_numbers<[1], [0], [0], [1], [0, 0, 1, 1], [], []>} : vector<16x512xf32>, vector<512x128xf32>, vector<16x128xf32> -> vector<16x128xf32>
    %c0_41 = arith.constant 0 : index
    %c0_42 = arith.constant 0 : index
    %110 = vector.load %arg12[%c0_41, %c0_42] : memref<1x128xf32, #tpu.memory_space<vmem>>, vector<1x128xf32>
    %111 = vector.shape_cast %110 : vector<1x128xf32> to vector<128xf32>
    %112 = vector.shape_cast %111 : vector<128xf32> to vector<1x128xf32>
    %113 = vector.broadcast %112 : vector<1x128xf32> to vector<16x128xf32>
    %114 = arith.addf %109, %113 : vector<16x128xf32>
    %115 = arith.addf %70, %114 : vector<16x128xf32>
    %c0_43 = arith.constant 0 : index
    %c0_44 = arith.constant 0 : index
    %c0_45 = arith.constant 0 : index
    %116 = vector.load %arg13[%c0_43, %c0_44, %c0_45] : memref<1x16x128xf32, #tpu.memory_space<vmem>>, vector<1x16x128xf32>
    %117 = vector.shape_cast %116 : vector<1x16x128xf32> to vector<16x128xf32>
    %118 = vector.shape_cast %115 : vector<16x128xf32> to vector<1x16x128xf32>
    tpu.vector_store %arg13[%c0_43, %c0_44, %c0_45], %118 {strides = array<i32>} : memref<1x16x128xf32, #tpu.memory_space<vmem>>, vector<1x16x128xf32>,
    return
  }
  func.func @transform_0(%arg0: i32) -> (i32, i32, i32) {
    %c0_i32 = arith.constant 0 : i32
    %c0_i32_0 = arith.constant 0 : i32
    %c0_i32_1 = arith.constant 0 : i32
    return %arg0, %c0_i32, %c0_i32_0 : i32, i32, i32
  }
  func.func @transform_1(%arg0: i32) -> (i32, i32) {
    %c0_i32 = arith.constant 0 : i32
    %c0_i32_0 = arith.constant 0 : i32
    %c0_i32_1 = arith.constant 0 : i32
    return %c0_i32, %c0_i32_0 : i32, i32
  }
  func.func @transform_2(%arg0: i32) -> (i32, i32) {
    %c0_i32 = arith.constant 0 : i32
    %c0_i32_0 = arith.constant 0 : i32
    %c0_i32_1 = arith.constant 0 : i32
    return %c0_i32, %c0_i32_0 : i32, i32
  }
  func.func @transform_3(%arg0: i32) -> (i32, i32) {
    %c0_i32 = arith.constant 0 : i32
    %c0_i32_0 = arith.constant 0 : i32
    %c0_i32_1 = arith.constant 0 : i32
    return %c0_i32, %c0_i32_0 : i32, i32
  }
  func.func @transform_4(%arg0: i32) -> (i32, i32) {
    %c0_i32 = arith.constant 0 : i32
    %c0_i32_0 = arith.constant 0 : i32
    %c0_i32_1 = arith.constant 0 : i32
    return %c0_i32, %c0_i32_0 : i32, i32
  }
  func.func @transform_5(%arg0: i32) -> (i32, i32) {
    %c0_i32 = arith.constant 0 : i32
    %c0_i32_0 = arith.constant 0 : i32
    %c0_i32_1 = arith.constant 0 : i32
    return %c0_i32, %c0_i32_0 : i32, i32
  }
  func.func @transform_6(%arg0: i32) -> (i32, i32) {
    %c0_i32 = arith.constant 0 : i32
    %c0_i32_0 = arith.constant 0 : i32
    %c0_i32_1 = arith.constant 0 : i32
    return %c0_i32, %c0_i32_0 : i32, i32
  }
  func.func @transform_7(%arg0: i32) -> (i32, i32) {
    %c0_i32 = arith.constant 0 : i32
    %c0_i32_0 = arith.constant 0 : i32
    %c0_i32_1 = arith.constant 0 : i32
    return %c0_i32, %c0_i32_0 : i32, i32
  }
  func.func @transform_8(%arg0: i32) -> (i32, i32) {
    %c0_i32 = arith.constant 0 : i32
    %c0_i32_0 = arith.constant 0 : i32
    %c0_i32_1 = arith.constant 0 : i32
    return %c0_i32, %c0_i32_0 : i32, i32
  }
  func.func @transform_9(%arg0: i32) -> (i32, i32) {
    %c0_i32 = arith.constant 0 : i32
    %c0_i32_0 = arith.constant 0 : i32
    %c0_i32_1 = arith.constant 0 : i32
    return %c0_i32, %c0_i32_0 : i32, i32
  }
  func.func @transform_10(%arg0: i32) -> (i32, i32) {
    %c0_i32 = arith.constant 0 : i32
    %c0_i32_0 = arith.constant 0 : i32
    %c0_i32_1 = arith.constant 0 : i32
    return %c0_i32, %c0_i32_0 : i32, i32
  }
  func.func @transform_11(%arg0: i32) -> (i32, i32) {
    %c0_i32 = arith.constant 0 : i32
    %c0_i32_0 = arith.constant 0 : i32
    %c0_i32_1 = arith.constant 0 : i32
    return %c0_i32, %c0_i32_0 : i32, i32
  }
  func.func @transform_12(%arg0: i32) -> (i32, i32, i32) {
    %c0_i32 = arith.constant 0 : i32
    %c0_i32_0 = arith.constant 0 : i32
    %c0_i32_1 = arith.constant 0 : i32
    return %arg0, %c0_i32, %c0_i32_0 : i32, i32, i32
  }
}

</mosaic_0001>

<llo_original>
// kernel: tpu_custom_call.1
$region0: #{tpu_custom_call.1}
  #allocation0 [shape = 'u32[]', space=smem, size = 0x4, offset = 0x4, fixed_abs, tag = 'smem constant byte address 0x4 - core index']
  #allocation1 [shape = 'u32[144,128]{1,0:T(1,128)}', space=vmem, size = 0x12000, scoped, tag = 'internal scratch']
  %s0 = inlined_call_operand.hbm [shape: f32[2,16,128], index: 0, kind: input, shape index: {}]
  %s1 = inlined_call_operand.vmem [shape: f32[1,128], index: 1, kind: input, shape index: {}]
  %s2 = inlined_call_operand.vmem [shape: f32[1,128], index: 2, kind: input, shape index: {}]
  %s3 = inlined_call_operand.hbm [shape: f32[128,384], index: 3, kind: input, shape index: {}]
  %s4 = inlined_call_operand.hbm [shape: f32[128,128], index: 4, kind: input, shape index: {}]
  %s5 = inlined_call_operand.vmem [shape: f32[1,128], index: 5, kind: input, shape index: {}]
  %s6 = inlined_call_operand.vmem [shape: f32[1,128], index: 6, kind: input, shape index: {}]
  %s7 = inlined_call_operand.vmem [shape: f32[1,128], index: 7, kind: input, shape index: {}]
  %s8 = inlined_call_operand.hbm [shape: f32[128,512], index: 8, kind: input, shape index: {}]
  %s9 = inlined_call_operand.vmem [shape: f32[1,512], index: 9, kind: input, shape index: {}]
  %s10 = inlined_call_operand.hbm [shape: f32[512,128], index: 10, kind: input, shape index: {}]
  %s11 = inlined_call_operand.vmem [shape: f32[1,128], index: 11, kind: input, shape index: {}]
  %s12 = inlined_call_operand.hbm [shape: f32[2,16,128], index: 12, kind: output, shape index: {}]
  %s13 = sld [smem:[#allocation0]]
  $region101: #{tpu_custom_call.1} parent=0
    _
  %s15 = ssub.s32 1, %s13
  %s16 = scalar_select 0, %s15, %s13
  $region1: #{tpu_custom_call.1} parent=0
    #allocation2 [shape = 'u8[16384]{0}', space=vmem, size = 0x4000, scoped, tag = 'input window, operand 0']
    #allocation3 [shape = 's32[2]{0}', space=sflag, size = 0x8, scoped, tag = 'scoped memory for tpu_custom_call.1']
    #allocation4 [shape = 's32[2]{0}', space=sflag, size = 0x8, scoped, tag = 'scoped memory for tpu_custom_call.1']
    #allocation5 [shape = 'u8[196608]{0}', space=vmem, size = 0x30000, scoped, tag = 'input window, operand 3, single buffered']
    #allocation6 [shape = 's32[1]{0}', space=sflag, size = 0x4, scoped, tag = 'scoped memory for tpu_custom_call.1']
    #allocation7 [shape = 'u8[65536]{0}', space=vmem, size = 0x10000, scoped, tag = 'input window, operand 4, single buffered']
    #allocation8 [shape = 'u8[262144]{0}', space=vmem, size = 0x40000, scoped, tag = 'input window, operand 8, single buffered']
    #allocation9 [shape = 's32[1]{0}', space=sflag, size = 0x4, scoped, tag = 'scoped memory for tpu_custom_call.1']
    #allocation10 [shape = 'u8[262144]{0}', space=vmem, size = 0x40000, scoped, tag = 'input window, operand 10, single buffered']
    #allocation11 [shape = 'u8[16384]{0}', space=vmem, size = 0x4000, scoped, tag = 'output window, operand 0']
    %17 = vsyncpa [#allocation3], 0
    %s18 = scalar_lea.sflag [#allocation3], 1
    %19 = vsyncpa %s18, 0
    %20 = vsyncpa [#allocation6], 0
    %21 = vsyncpa [#allocation9], 0
    %22 = vsyncpa [#allocation4], 0
    %s23 = scalar_lea.sflag [#allocation4], 1
    %24 = vsyncpa %s23, 0
    loop: start=0, step=1, limit=4
    $region2: #{tpu_custom_call.1} parent=1 // loop_pre_header
      _
    $region3: #{tpu_custom_call.1} parent=1 // loop_header
      %s26 = sphi 0, %s30
      %p27 = scmp.ge.s32.totalorder %s26, 4
      %s36 = sphi 0, %s38
      %s39 = sphi 0, %s36
      %s40 = sphi 0, %s39
      %s56 = sphi 0, %s40
      %s60 = sphi 0, %s60
      %s62 = sphi 0, %s60
      %s63 = sphi 0, %s62
      %s77 = sphi 0, %s63
      %s81 = sphi 0, %s81
      %s83 = sphi 0, %s81
      %s84 = sphi 0, %s83
      %s98 = sphi 0, %s84
      %s102 = sphi 0, %s102
      %s104 = sphi 0, %s102
      %s105 = sphi 0, %s104
      %s119 = sphi 0, %s105
      %s123 = sphi 0, %s123
      %s125 = sphi 0, %s123
      %s126 = sphi 0, %s125
      %s140 = sphi 0, %s126
      %s144 = sphi 0, %s144
      %s146 = sphi 0, %s144
      %s147 = sphi 0, %s146
      %s161 = sphi 0, %s147
      %s165 = sphi 0, %s165
      %s167 = sphi 0, %s165
      %s168 = sphi 0, %s167
      %s182 = sphi 0, %s168
      %s186 = sphi 0, %s186
      %s188 = sphi 0, %s186
      %s189 = sphi 0, %s188
      %s203 = sphi 0, %s189
      %s207 = sphi 0, %s207
      %s209 = sphi 0, %s207
      %s210 = sphi 0, %s209
      %s224 = sphi 0, %s210
      %s228 = sphi 0, %s228
      %s230 = sphi 0, %s228
      %s231 = sphi 0, %s230
      %s245 = sphi 0, %s231
      %s249 = sphi 0, %s249
      %s251 = sphi 0, %s249
      %s252 = sphi 0, %s251
      %s266 = sphi 0, %s252
      %s270 = sphi 0, %s270
      %s272 = sphi 0, %s270
      %s273 = sphi 0, %s272
      %s287 = sphi 0, %s273
      %s293 = sphi 0, %s295
      %s296 = sphi 0, %s293
      %s297 = sphi 0, %s296
      %s313 = sphi 0, %s297
    $region4: #{tpu_custom_call.1} parent=1 // loop_header_branch
      %29 = sbr.rel (%p27) target = $region8
    $region5: #{tpu_custom_call.1} parent=1 // loop_body
      %s31 = ssub.s32 %s26, 1
      %s32 = ssub.s32 %s26, 2
      %s33 = sadd.s32 %s26, 1
      %s34 = ssub.s32 %s26, %s33
      %p35 = scmp.eq.s32.totalorder %s34, 0
      %s37 = sadd.s32 %s36, 1
      %s38 = scalar_select %p35, %s36, %s37
      %p41 = pneg %p35
      %p42 = scmp.eq.s32.totalorder %s26, 1
      %p43 = por %p41, %p42
      %p44 = scmp.ne.s32.totalorder %s36, %s39
      %p45 = scmp.eq.s32.totalorder %s26, 0
      %p46 = por %p44, %p45
      %p47 = scmp.ne.s32.totalorder %s36, %s39
      %p48 = scmp.eq.s32.totalorder %s31, 1
      %p49 = por %p47, %p48
      %p50 = scmp.ne.s32.totalorder %s39, %s40
      %p51 = scmp.eq.s32.totalorder %s31, 0
      %p52 = por %p50, %p51
      %p53 = scmp.ne.s32.totalorder %s39, %s40
      %p54 = scmp.eq.s32.totalorder %s32, 1
      %p55 = por %p53, %p54
      %p57 = scmp.ne.s32.totalorder %s40, %s56
      %p58 = scmp.eq.s32.totalorder %s32, 0
      %p59 = por %p57, %p58
      %s61 = sadd.s32 %s60, 1
      %p64 = scmp.eq.s32.totalorder %s26, 1
      %p65 = scmp.ne.s32.totalorder %s60, %s62
      %p66 = scmp.eq.s32.totalorder %s26, 0
      %p67 = por %p65, %p66
      %p68 = scmp.ne.s32.totalorder %s60, %s62
      %p69 = scmp.eq.s32.totalorder %s31, 1
      %p70 = por %p68, %p69
      %p71 = scmp.ne.s32.totalorder %s62, %s63
      %p72 = scmp.eq.s32.totalorder %s31, 0
      %p73 = por %p71, %p72
      %p74 = scmp.ne.s32.totalorder %s62, %s63
      %p75 = scmp.eq.s32.totalorder %s32, 1
      %p76 = por %p74, %p75
      %p78 = scmp.ne.s32.totalorder %s63, %s77
      %p79 = scmp.eq.s32.totalorder %s32, 0
      %p80 = por %p78, %p79
      %s82 = sadd.s32 %s81, 1
      %p85 = scmp.eq.s32.totalorder %s26, 1
      %p86 = scmp.ne.s32.totalorder %s81, %s83
      %p87 = scmp.eq.s32.totalorder %s26, 0
      %p88 = por %p86, %p87
      %p89 = scmp.ne.s32.totalorder %s81, %s83
      %p90 = scmp.eq.s32.totalorder %s31, 1
      %p91 = por %p89, %p90
      %p92 = scmp.ne.s32.totalorder %s83, %s84
      %p93 = scmp.eq.s32.totalorder %s31, 0
      %p94 = por %p92, %p93
      %p95 = scmp.ne.s32.totalorder %s83, %s84
      %p96 = scmp.eq.s32.totalorder %s32, 1
      %p97 = por %p95, %p96
      %p99 = scmp.ne.s32.totalorder %s84, %s98
      %p100 = scmp.eq.s32.totalorder %s32, 0
      %p101 = por %p99, %p100
      %s103 = sadd.s32 %s102, 1
      %p106 = scmp.eq.s32.totalorder %s26, 1
      %p107 = scmp.ne.s32.totalorder %s102, %s104
      %p108 = scmp.eq.s32.totalorder %s26, 0
      %p109 = por %p107, %p108
      %p110 = scmp.ne.s32.totalorder %s102, %s104
      %p111 = scmp.eq.s32.totalorder %s31, 1
      %p112 = por %p110, %p111
      %p113 = scmp.ne.s32.totalorder %s104, %s105
      %p114 = scmp.eq.s32.totalorder %s31, 0
      %p115 = por %p113, %p114
      %p116 = scmp.ne.s32.totalorder %s104, %s105
      %p117 = scmp.eq.s32.totalorder %s32, 1
      %p118 = por %p116, %p117
      %p120 = scmp.ne.s32.totalorder %s105, %s119
      %p121 = scmp.eq.s32.totalorder %s32, 0
      %p122 = por %p120, %p121
      %s124 = sadd.s32 %s123, 1
      %p127 = scmp.eq.s32.totalorder %s26, 1
      %p128 = scmp.ne.s32.totalorder %s123, %s125
      %p129 = scmp.eq.s32.totalorder %s26, 0
      %p130 = por %p128, %p129
      %p131 = scmp.ne.s32.totalorder %s123, %s125
      %p132 = scmp.eq.s32.totalorder %s31, 1
      %p133 = por %p131, %p132
      %p134 = scmp.ne.s32.totalorder %s125, %s126
      %p135 = scmp.eq.s32.totalorder %s31, 0
      %p136 = por %p134, %p135
      %p137 = scmp.ne.s32.totalorder %s125, %s126
      %p138 = scmp.eq.s32.totalorder %s32, 1
      %p139 = por %p137, %p138
      %p141 = scmp.ne.s32.totalorder %s126, %s140
      %p142 = scmp.eq.s32.totalorder %s32, 0
      %p143 = por %p141, %p142
      %s145 = sadd.s32 %s144, 1
      %p148 = scmp.eq.s32.totalorder %s26, 1
      %p149 = scmp.ne.s32.totalorder %s144, %s146
      %p150 = scmp.eq.s32.totalorder %s26, 0
      %p151 = por %p149, %p150
      %p152 = scmp.ne.s32.totalorder %s144, %s146
      %p153 = scmp.eq.s32.totalorder %s31, 1
      %p154 = por %p152, %p153
      %p155 = scmp.ne.s32.totalorder %s146, %s147
      %p156 = scmp.eq.s32.totalorder %s31, 0
      %p157 = por %p155, %p156
      %p158 = scmp.ne.s32.totalorder %s146, %s147
      %p159 = scmp.eq.s32.totalorder %s32, 1
      %p160 = por %p158, %p159
      %p162 = scmp.ne.s32.totalorder %s147, %s161
      %p163 = scmp.eq.s32.totalorder %s32, 0
      %p164 = por %p162, %p163
      %s166 = sadd.s32 %s165, 1
      %p169 = scmp.eq.s32.totalorder %s26, 1
      %p170 = scmp.ne.s32.totalorder %s165, %s167
      %p171 = scmp.eq.s32.totalorder %s26, 0
      %p172 = por %p170, %p171
      %p173 = scmp.ne.s32.totalorder %s165, %s167
      %p174 = scmp.eq.s32.totalorder %s31, 1
      %p175 = por %p173, %p174
      %p176 = scmp.ne.s32.totalorder %s167, %s168
      %p177 = scmp.eq.s32.totalorder %s31, 0
      %p178 = por %p176, %p177
      %p179 = scmp.ne.s32.totalorder %s167, %s168
      %p180 = scmp.eq.s32.totalorder %s32, 1
      %p181 = por %p179, %p180
      %p183 = scmp.ne.s32.totalorder %s168, %s182
      %p184 = scmp.eq.s32.totalorder %s32, 0
      %p185 = por %p183, %p184
      %s187 = sadd.s32 %s186, 1
      %p190 = scmp.eq.s32.totalorder %s26, 1
      %p191 = scmp.ne.s32.totalorder %s186, %s188
      %p192 = scmp.eq.s32.totalorder %s26, 0
      %p193 = por %p191, %p192
      %p194 = scmp.ne.s32.totalorder %s186, %s188
      %p195 = scmp.eq.s32.totalorder %s31, 1
      %p196 = por %p194, %p195
      %p197 = scmp.ne.s32.totalorder %s188, %s189
      %p198 = scmp.eq.s32.totalorder %s31, 0
      %p199 = por %p197, %p198
      %p200 = scmp.ne.s32.totalorder %s188, %s189
      %p201 = scmp.eq.s32.totalorder %s32, 1
      %p202 = por %p200, %p201
      %p204 = scmp.ne.s32.totalorder %s189, %s203
      %p205 = scmp.eq.s32.totalorder %s32, 0
      %p206 = por %p204, %p205
      %s208 = sadd.s32 %s207, 1
      %p211 = scmp.eq.s32.totalorder %s26, 1
      %p212 = scmp.ne.s32.totalorder %s207, %s209
      %p213 = scmp.eq.s32.totalorder %s26, 0
      %p214 = por %p212, %p213
      %p215 = scmp.ne.s32.totalorder %s207, %s209
      %p216 = scmp.eq.s32.totalorder %s31, 1
      %p217 = por %p215, %p216
      %p218 = scmp.ne.s32.totalorder %s209, %s210
      %p219 = scmp.eq.s32.totalorder %s31, 0
      %p220 = por %p218, %p219
      %p221 = scmp.ne.s32.totalorder %s209, %s210
      %p222 = scmp.eq.s32.totalorder %s32, 1
      %p223 = por %p221, %p222
      %p225 = scmp.ne.s32.totalorder %s210, %s224
      %p226 = scmp.eq.s32.totalorder %s32, 0
      %p227 = por %p225, %p226
      %s229 = sadd.s32 %s228, 1
      %p232 = scmp.eq.s32.totalorder %s26, 1
      %p233 = scmp.ne.s32.totalorder %s228, %s230
      %p234 = scmp.eq.s32.totalorder %s26, 0
      %p235 = por %p233, %p234
      %p236 = scmp.ne.s32.totalorder %s228, %s230
      %p237 = scmp.eq.s32.totalorder %s31, 1
      %p238 = por %p236, %p237
      %p239 = scmp.ne.s32.totalorder %s230, %s231
      %p240 = scmp.eq.s32.totalorder %s31, 0
      %p241 = por %p239, %p240
      %p242 = scmp.ne.s32.totalorder %s230, %s231
      %p243 = scmp.eq.s32.totalorder %s32, 1
      %p244 = por %p242, %p243
      %p246 = scmp.ne.s32.totalorder %s231, %s245
      %p247 = scmp.eq.s32.totalorder %s32, 0
      %p248 = por %p246, %p247
      %s250 = sadd.s32 %s249, 1
      %p253 = scmp.eq.s32.totalorder %s26, 1
      %p254 = scmp.ne.s32.totalorder %s249, %s251
      %p255 = scmp.eq.s32.totalorder %s26, 0
      %p256 = por %p254, %p255
      %p257 = scmp.ne.s32.totalorder %s249, %s251
      %p258 = scmp.eq.s32.totalorder %s31, 1
      %p259 = por %p257, %p258
      %p260 = scmp.ne.s32.totalorder %s251, %s252
      %p261 = scmp.eq.s32.totalorder %s31, 0
      %p262 = por %p260, %p261
      %p263 = scmp.ne.s32.totalorder %s251, %s252
      %p264 = scmp.eq.s32.totalorder %s32, 1
      %p265 = por %p263, %p264
      %p267 = scmp.ne.s32.totalorder %s252, %s266
      %p268 = scmp.eq.s32.totalorder %s32, 0
      %p269 = por %p267, %p268
      %s271 = sadd.s32 %s270, 1
      %p274 = scmp.eq.s32.totalorder %s26, 1
      %p275 = scmp.ne.s32.totalorder %s270, %s272
      %p276 = scmp.eq.s32.totalorder %s26, 0
      %p277 = por %p275, %p276
      %p278 = scmp.ne.s32.totalorder %s270, %s272
      %p279 = scmp.eq.s32.totalorder %s31, 1
      %p280 = por %p278, %p279
      %p281 = scmp.ne.s32.totalorder %s272, %s273
      %p282 = scmp.eq.s32.totalorder %s31, 0
      %p283 = por %p281, %p282
      %p284 = scmp.ne.s32.totalorder %s272, %s273
      %p285 = scmp.eq.s32.totalorder %s32, 1
      %p286 = por %p284, %p285
      %p288 = scmp.ne.s32.totalorder %s273, %s287
      %p289 = scmp.eq.s32.totalorder %s32, 0
      %p290 = por %p288, %p289
      %s291 = ssub.s32 %s26, %s33
      %p292 = scmp.eq.s32.totalorder %s291, 0
      %s294 = sadd.s32 %s293, 1
      %s295 = scalar_select %p292, %s293, %s294
      %p298 = pneg %p292
      %p299 = scmp.eq.s32.totalorder %s26, 1
      %p300 = por %p298, %p299
      %p301 = scmp.ne.s32.totalorder %s293, %s296
      %p302 = scmp.eq.s32.totalorder %s26, 0
      %p303 = por %p301, %p302
      %p304 = scmp.ne.s32.totalorder %s293, %s296
      %p305 = scmp.eq.s32.totalorder %s31, 1
      %p306 = por %p304, %p305
      %p307 = scmp.ne.s32.totalorder %s296, %s297
      %p308 = scmp.eq.s32.totalorder %s31, 0
      %p309 = por %p307, %p308
      %p310 = scmp.ne.s32.totalorder %s296, %s297
      %p311 = scmp.eq.s32.totalorder %s32, 1
      %p312 = por %p310, %p311
      %p314 = scmp.ne.s32.totalorder %s297, %s313
      %p315 = scmp.eq.s32.totalorder %s32, 0
      %p316 = por %p314, %p315
      %p317 = scmp.le.s32.totalorder 1, %s26
      %p318 = scmp.lt.s32.totalorder %s26, 3
      %p319 = pnand %p317, %p318
      %p320 = pneg %p319
      // Predicated region
      $region9: #{tpu_custom_call.1} parent=5 // pred_check
        _
      $region10: #{tpu_custom_call.1} parent=5 // pred_check_branch
        %322 = sbr.rel (%p319) target = $region12
      $region11: #{tpu_custom_call.1} parent=5 // pred_region
        %s323 = ssub.s32 %s26, 1
        // Predicated region
        $region13: #{tpu_custom_call.1} parent=11 // pred_check
          %p324 = pneg %p73
        $region14: #{tpu_custom_call.1} parent=11 // pred_check_branch
          %326 = sbr.rel (%p324) target = $region16
        $region15: #{tpu_custom_call.1} parent=11 // pred_region
          _
        $region16: #{tpu_custom_call.1} parent=11 // pred_fallthru
          _
        // Predicated region
        $region17: #{tpu_custom_call.1} parent=11 // pred_check
          %p327 = pneg %p94
        $region18: #{tpu_custom_call.1} parent=11 // pred_check_branch
          %329 = sbr.rel (%p327) target = $region20
        $region19: #{tpu_custom_call.1} parent=11 // pred_region
          _
        $region20: #{tpu_custom_call.1} parent=11 // pred_fallthru
          _
        // Predicated region
        $region21: #{tpu_custom_call.1} parent=11 // pred_check
          %p330 = pneg %p115
        $region22: #{tpu_custom_call.1} parent=11 // pred_check_branch
          %332 = sbr.rel (%p330) target = $region24
        $region23: #{tpu_custom_call.1} parent=11 // pred_region
          %s334 = ssub.s32 6144, 6144
          %335 = vsyncadd [#allocation6], %s334
          %s336 = sshll.u32 [#allocation5], 4
          %s337 = int_to_ptr.vmem [resolvable:$true] %s336
          %342 = dma.hbm_to_vmem [thread:$0]  %s3, 6144, %s337, [#allocation6], 384, 384, 24
        $region24: #{tpu_custom_call.1} parent=11 // pred_fallthru
          _
        // Predicated region
        $region25: #{tpu_custom_call.1} parent=11 // pred_check
          %p343 = pneg %p136
        $region26: #{tpu_custom_call.1} parent=11 // pred_check_branch
          %345 = sbr.rel (%p343) target = $region28
        $region27: #{tpu_custom_call.1} parent=11 // pred_region
          %s347 = ssub.s32 2048, 2048
          %348 = vsyncadd [#allocation6], %s347
          %s349 = sshll.u32 [#allocation7], 4
          %s350 = int_to_ptr.vmem [resolvable:$true] %s349
          %355 = dma.hbm_to_vmem [thread:$0]  %s4, 2048, %s350, [#allocation6], 128, 128, 8
        $region28: #{tpu_custom_call.1} parent=11 // pred_fallthru
          _
        // Predicated region
        $region29: #{tpu_custom_call.1} parent=11 // pred_check
          %p356 = pneg %p157
        $region30: #{tpu_custom_call.1} parent=11 // pred_check_branch
          %358 = sbr.rel (%p356) target = $region32
        $region31: #{tpu_custom_call.1} parent=11 // pred_region
          _
        $region32: #{tpu_custom_call.1} parent=11 // pred_fallthru
          _
        // Predicated region
        $region33: #{tpu_custom_call.1} parent=11 // pred_check
          %p359 = pneg %p178
        $region34: #{tpu_custom_call.1} parent=11 // pred_check_branch
          %361 = sbr.rel (%p359) target = $region36
        $region35: #{tpu_custom_call.1} parent=11 // pred_region
          _
        $region36: #{tpu_custom_call.1} parent=11 // pred_fallthru
          _
        // Predicated region
        $region37: #{tpu_custom_call.1} parent=11 // pred_check
          %p362 = pneg %p199
        $region38: #{tpu_custom_call.1} parent=11 // pred_check_branch
          %364 = sbr.rel (%p362) target = $region40
        $region39: #{tpu_custom_call.1} parent=11 // pred_region
          _
        $region40: #{tpu_custom_call.1} parent=11 // pred_fallthru
          _
        // Predicated region
        $region41: #{tpu_custom_call.1} parent=11 // pred_check
          %p365 = pneg %p220
        $region42: #{tpu_custom_call.1} parent=11 // pred_check_branch
          %367 = sbr.rel (%p365) target = $region44
        $region43: #{tpu_custom_call.1} parent=11 // pred_region
          %s369 = ssub.s32 8192, 8192
          %370 = vsyncadd [#allocation9], %s369
          %s371 = sshll.u32 [#allocation8], 4
          %s372 = int_to_ptr.vmem [resolvable:$true] %s371
          %377 = dma.hbm_to_vmem [thread:$0]  %s8, 8192, %s372, [#allocation9], 512, 512, 32
        $region44: #{tpu_custom_call.1} parent=11 // pred_fallthru
          _
        // Predicated region
        $region45: #{tpu_custom_call.1} parent=11 // pred_check
          %p378 = pneg %p241
        $region46: #{tpu_custom_call.1} parent=11 // pred_check_branch
          %380 = sbr.rel (%p378) target = $region48
        $region47: #{tpu_custom_call.1} parent=11 // pred_region
          _
        $region48: #{tpu_custom_call.1} parent=11 // pred_fallthru
          _
        // Predicated region
        $region49: #{tpu_custom_call.1} parent=11 // pred_check
          %p381 = pneg %p262
        $region50: #{tpu_custom_call.1} parent=11 // pred_check_branch
          %383 = sbr.rel (%p381) target = $region52
        $region51: #{tpu_custom_call.1} parent=11 // pred_region
          %s385 = ssub.s32 8192, 8192
          %386 = vsyncadd [#allocation9], %s385
          %s387 = sshll.u32 [#allocation10], 4
          %s388 = int_to_ptr.vmem [resolvable:$true] %s387
          %393 = dma.hbm_to_vmem [thread:$0]  %s10, 8192, %s388, [#allocation9], 128, 128, 8
        $region52: #{tpu_custom_call.1} parent=11 // pred_fallthru
          _
        // Predicated region
        $region53: #{tpu_custom_call.1} parent=11 // pred_check
          %p394 = pneg %p283
        $region54: #{tpu_custom_call.1} parent=11 // pred_check_branch
          %396 = sbr.rel (%p394) target = $region56
        $region55: #{tpu_custom_call.1} parent=11 // pred_region
          _
        $region56: #{tpu_custom_call.1} parent=11 // pred_fallthru
          _
      $region12: #{tpu_custom_call.1} parent=5 // pred_fallthru
        _
      %p397 = scmp.lt.s32.totalorder %s26, 2
      // Predicated region
      $region57: #{tpu_custom_call.1} parent=5 // pred_check
        %p398 = pneg %p397
      $region58: #{tpu_custom_call.1} parent=5 // pred_check_branch
        %400 = sbr.rel (%p398) target = $region60
      $region59: #{tpu_custom_call.1} parent=5 // pred_region
        // Predicated region
        $region61: #{tpu_custom_call.1} parent=59 // pred_check
          %p401 = pneg %p46
        $region62: #{tpu_custom_call.1} parent=59 // pred_check_branch
          %403 = sbr.rel (%p401) target = $region64
        $region63: #{tpu_custom_call.1} parent=59 // pred_region
          %s404 = sand.u32 %s36, 1
          %s405 = scalar_lea.sflag [#allocation3], %s404
          %s406 = sand.u32 %s36, 1
          %s407 = smul.addr %s406, 16
          %s408 = scalar_lea.vmem [#allocation2], %s407
          %s410 = ssub.s32 256, 256
          %411 = vsyncadd %s405, %s410
          %s412 = smul.addr %s26, 2
          %s413 = smul.addr %s412, 128
          %s414 = scalar_lea.hbm %s0, %s413
          %s415 = sshll.u32 %s408, 4
          %s416 = int_to_ptr.vmem [resolvable:$true] %s415
          %421 = dma.hbm_to_vmem [thread:$0]  %s414, 256, %s416, %s405, 128, 128, 8
        $region64: #{tpu_custom_call.1} parent=59 // pred_fallthru
          _
      $region60: #{tpu_custom_call.1} parent=5 // pred_fallthru
        _
      %p422 = scmp.le.s32.totalorder 1, %s26
      %p423 = scmp.lt.s32.totalorder %s26, 3
      %p424 = pnand %p422, %p423
      %p425 = pneg %p424
      // Predicated region
      $region65: #{tpu_custom_call.1} parent=5 // pred_check
        _
      $region66: #{tpu_custom_call.1} parent=5 // pred_check_branch
        %427 = sbr.rel (%p424) target = $region68
      $region67: #{tpu_custom_call.1} parent=5 // pred_region
        %s428 = ssub.s32 %s26, 1
        %s429 = sand.u32 %s39, 1
        %s430 = scalar_lea.sflag [#allocation3], %s429
        %s431 = sand.u32 %s39, 1
        %s432 = smul.addr %s431, 16
        %s433 = scalar_lea.vmem [#allocation2], %s432
        // Predicated region
        $region69: #{tpu_custom_call.1} parent=67 // pred_check
          %p434 = pneg %p52
        $region70: #{tpu_custom_call.1} parent=67 // pred_check_branch
          %436 = sbr.rel (%p434) target = $region72
        $region71: #{tpu_custom_call.1} parent=67 // pred_region
          %437 = dma.done %s430, 256
        $region72: #{tpu_custom_call.1} parent=67 // pred_fallthru
          _
        // Predicated region
        $region73: #{tpu_custom_call.1} parent=67 // pred_check
          %p438 = pneg %p115
        $region74: #{tpu_custom_call.1} parent=67 // pred_check_branch
          %440 = sbr.rel (%p438) target = $region76
        $region75: #{tpu_custom_call.1} parent=67 // pred_region
          %441 = dma.done [#allocation6], 6144
        $region76: #{tpu_custom_call.1} parent=67 // pred_fallthru
          _
        // Predicated region
        $region77: #{tpu_custom_call.1} parent=67 // pred_check
          %p442 = pneg %p136
        $region78: #{tpu_custom_call.1} parent=67 // pred_check_branch
          %444 = sbr.rel (%p442) target = $region80
        $region79: #{tpu_custom_call.1} parent=67 // pred_region
          %445 = dma.done [#allocation6], 2048
        $region80: #{tpu_custom_call.1} parent=67 // pred_fallthru
          _
        // Predicated region
        $region81: #{tpu_custom_call.1} parent=67 // pred_check
          %p446 = pneg %p220
        $region82: #{tpu_custom_call.1} parent=67 // pred_check_branch
          %448 = sbr.rel (%p446) target = $region84
        $region83: #{tpu_custom_call.1} parent=67 // pred_region
          %449 = dma.done [#allocation9], 8192
        $region84: #{tpu_custom_call.1} parent=67 // pred_fallthru
          _
        // Predicated region
        $region85: #{tpu_custom_call.1} parent=67 // pred_check
          %p450 = pneg %p262
        $region86: #{tpu_custom_call.1} parent=67 // pred_check_branch
          %452 = sbr.rel (%p450) target = $region88
        $region87: #{tpu_custom_call.1} parent=67 // pred_region
          %453 = dma.done [#allocation9], 8192
        $region88: #{tpu_custom_call.1} parent=67 // pred_fallthru
          _
        %s454 = sand.u32 %s39, 1
        %s455 = scalar_lea.sflag [#allocation3], %s454
        %s456 = sand.u32 %s39, 1
        %s457 = smul.addr %s456, 16
        %s458 = scalar_lea.vmem [#allocation2], %s457
        %p459 = pneg %p52
        %p460 = pneg %p49
        %p461 = pneg %p73
        %p462 = pneg %p70
        %p463 = pneg %p94
        %p464 = pneg %p91
        %p465 = pneg %p115
        %p466 = pneg %p112
        %p467 = pneg %p136
        %p468 = pneg %p133
        %p469 = pneg %p157
        %p470 = pneg %p154
        %p471 = pneg %p178
        %p472 = pneg %p175
        %p473 = pneg %p199
        %p474 = pneg %p196
        %p475 = pneg %p220
        %p476 = pneg %p217
        %p477 = pneg %p241
        %p478 = pneg %p238
        %p479 = pneg %p262
        %p480 = pneg %p259
        %p481 = pneg %p283
        %p482 = pneg %p280
        %p483 = pneg %p309
        %p484 = pneg %p306
        %s485 = sand.u32 %s296, 1
        %s486 = scalar_lea.sflag [#allocation4], %s485
        %s487 = sand.u32 %s296, 1
        %s488 = smul.addr %s487, 16
        %s489 = scalar_lea.vmem [#allocation11], %s488
        %v490 = vld [vmem:[%s433] sm:$0xff]
        %v491 = vld [vmem:[%s433 + $0x8] sm:$0xff]
        %v492 = vld [vmem:[%s1] sm:$0x1]
        %v493 = vld [vmem:[%s2] sm:$0x1]
        %494 = vadd.xlane.f32.xlu0 %v490
        %v495 = vpop.xlane.xlu0 %494
        %496 = vadd.xlane.f32.xlu0 %v491
        %v497 = vpop.xlane.xlu0 %496
        %v498 = vrcp.pop 128.0
        %v499 = vmul.f32 %v495, %v498
        %v500 = vmul.f32 %v497, %v498
        %v501 = vsub.f32 %v490, %v499
        %v502 = vsub.f32 %v491, %v500
        %v503 = vmul.f32 %v501, %v501
        %v504 = vmul.f32 %v502, %v502
        %505 = vadd.xlane.f32.xlu0 %v503
        %v506 = vpop.xlane.xlu0 %505
        %507 = vadd.xlane.f32.xlu0 %v504
        %v508 = vpop.xlane.xlu0 %507
        %v509 = vmul.f32 %v506, %v498
        %v510 = vmul.f32 %v508, %v498
        %v511 = vadd.f32 %v509, 1e-05
        %v512 = vadd.f32 %v510, 1e-05
        %v513 = vrsqrt.pop %v511
        %v514 = vrsqrt.pop %v512
        %v515 = vmul.f32 %v501, %v513
        %v516 = vmul.f32 %v502, %v514
        %v518 = vlaneseq
        %v519 = vshrl.u32 %v518, 7
        %v520 = vsub.s32 0, %v519
        %v521 = vrot.slane %v492, %v520
        %v523 = vmul.f32 %v515, %v521
        %v524 = vmul.f32 %v516, %v521
        %v526 = vlaneseq
        %v527 = vshrl.u32 %v526, 7
        %v528 = vsub.s32 0, %v527
        %v529 = vrot.slane %v493, %v528
        %v531 = vadd.f32 %v523, %v529
        %v532 = vadd.f32 %v524, %v529
        %v533 = vld [vmem:[#allocation5] sm:$0xff]
        %v534 = vld [vmem:[#allocation5 + $0x8] sm:$0xff]
        %v535 = vld [vmem:[#allocation5 + $0x10] sm:$0xff]
        %v536 = vld [vmem:[#allocation5 + $0x18] sm:$0xff]
        %v537 = vld [vmem:[#allocation5 + $0x20] sm:$0xff]
        %v538 = vld [vmem:[#allocation5 + $0x28] sm:$0xff]
        %v539 = vld [vmem:[#allocation5 + $0x30] sm:$0xff]
        %v540 = vld [vmem:[#allocation5 + $0x38] sm:$0xff]
        %v541 = vld [vmem:[#allocation5 + $0x40] sm:$0xff]
        %v542 = vld [vmem:[#allocation5 + $0x48] sm:$0xff]
        %v543 = vld [vmem:[#allocation5 + $0x50] sm:$0xff]
        %v544 = vld [vmem:[#allocation5 + $0x58] sm:$0xff]
        %v545 = vld [vmem:[#allocation5 + $0x60] sm:$0xff]
        %v546 = vld [vmem:[#allocation5 + $0x68] sm:$0xff]
        %v547 = vld [vmem:[#allocation5 + $0x70] sm:$0xff]
        %v548 = vld [vmem:[#allocation5 + $0x78] sm:$0xff]
        %v549 = vld [vmem:[#allocation5 + $0x80] sm:$0xff]
        %v550 = vld [vmem:[#allocation5 + $0x88] sm:$0xff]
        %v551 = vld [vmem:[#allocation5 + $0x90] sm:$0xff]
        %v552 = vld [vmem:[#allocation5 + $0x98] sm:$0xff]
        %v553 = vld [vmem:[#allocation5 + $0xa0] sm:$0xff]
        %v554 = vld [vmem:[#allocation5 + $0xa8] sm:$0xff]
        %v555 = vld [vmem:[#allocation5 + $0xb0] sm:$0xff]
        %v556 = vld [vmem:[#allocation5 + $0xb8] sm:$0xff]
        %v557 = vld [vmem:[#allocation5 + $0xc0] sm:$0xff]
        %v558 = vld [vmem:[#allocation5 + $0xc8] sm:$0xff]
        %v559 = vld [vmem:[#allocation5 + $0xd0] sm:$0xff]
        %v560 = vld [vmem:[#allocation5 + $0xd8] sm:$0xff]
        %v561 = vld [vmem:[#allocation5 + $0xe0] sm:$0xff]
        %v562 = vld [vmem:[#allocation5 + $0xe8] sm:$0xff]
        %v563 = vld [vmem:[#allocation5 + $0xf0] sm:$0xff]
        %v564 = vld [vmem:[#allocation5 + $0xf8] sm:$0xff]
        %v565 = vld [vmem:[#allocation5 + $0x100] sm:$0xff]
        %v566 = vld [vmem:[#allocation5 + $0x108] sm:$0xff]
        %v567 = vld [vmem:[#allocation5 + $0x110] sm:$0xff]
        %v568 = vld [vmem:[#allocation5 + $0x118] sm:$0xff]
        %v569 = vld [vmem:[#allocation5 + $0x120] sm:$0xff]
        %v570 = vld [vmem:[#allocation5 + $0x128] sm:$0xff]
        %v571 = vld [vmem:[#allocation5 + $0x130] sm:$0xff]
        %v572 = vld [vmem:[#allocation5 + $0x138] sm:$0xff]
        %v573 = vld [vmem:[#allocation5 + $0x140] sm:$0xff]
        %v574 = vld [vmem:[#allocation5 + $0x148] sm:$0xff]
        %v575 = vld [vmem:[#allocation5 + $0x150] sm:$0xff]
        %v576 = vld [vmem:[#allocation5 + $0x158] sm:$0xff]
        %v577 = vld [vmem:[#allocation5 + $0x160] sm:$0xff]
        %v578 = vld [vmem:[#allocation5 + $0x168] sm:$0xff]
        %v579 = vld [vmem:[#allocation5 + $0x170] sm:$0xff]
        %v580 = vld [vmem:[#allocation5 + $0x178] sm:$0xff]
        %581 = vmatprep.subr.mxu0 %v534
        %582 = vmatpush1.msra.mxu0 %v533
        %583 = vmatprep.subr.mxu0 %v537
        %584 = vmatpush1.msra.mxu0 %v536
        %585 = vmatprep.subr.mxu0 %v540
        %586 = vmatpush1.msra.mxu0 %v539
        %587 = vmatprep.subr.mxu0 %v543
        %588 = vmatpush1.msra.mxu0 %v542
        %589 = vmatprep.subr.mxu0 %v546
        %590 = vmatpush1.msra.mxu0 %v545
        %591 = vmatprep.subr.mxu0 %v549
        %592 = vmatpush1.msra.mxu0 %v548
        %593 = vmatprep.subr.mxu0 %v552
        %594 = vmatpush1.msra.mxu0 %v551
        %595 = vmatprep.subr.mxu0 %v555
        %596 = vmatpush1.msra.mxu0 %v554
        %597 = vmatprep.subr.mxu0 %v558
        %598 = vmatpush1.msra.mxu0 %v557
        %599 = vmatprep.subr.mxu0 %v561
        %600 = vmatpush1.msra.mxu0 %v560
        %601 = vmatprep.subr.mxu0 %v564
        %602 = vmatpush1.msra.mxu0 %v563
        %603 = vmatprep.subr.mxu0 %v567
        %604 = vmatpush1.msra.mxu0 %v566
        %605 = vmatprep.subr.mxu0 %v570
        %606 = vmatpush1.msra.mxu0 %v569
        %607 = vmatprep.subr.mxu0 %v573
        %608 = vmatpush1.msra.mxu0 %v572
        %609 = vmatprep.subr.mxu0 %v576
        %610 = vmatpush1.msra.mxu0 %v575
        %611 = vmatprep.subr.mxu0 %v579
        %612 = vmatpush1.msra.mxu0 %v578
        %613 = vmatprep.subr.mxu0 0.0
        %614 = vmatpush1.msra.mxu0 0.0
        %615 = vmatprep.subr.mxu0 0.0
        %616 = vmatpush1.msra.mxu0 0.0
        %617 = vmatprep.subr.mxu0 0.0
        %618 = vmatpush1.msra.mxu0 0.0
        %619 = vmatprep.subr.mxu0 0.0
        %620 = vmatpush1.msra.mxu0 0.0
        %621 = vmatprep.subr.mxu0 0.0
        %622 = vmatpush1.msra.mxu0 0.0
        %623 = vmatprep.subr.mxu0 0.0
        %624 = vmatpush1.msra.mxu0 0.0
        %625 = vmatprep.subr.mxu0 0.0
        %626 = vmatpush1.msra.mxu0 0.0
        %627 = vmatprep.subr.mxu0 0.0
        %628 = vmatpush1.msra.mxu0 0.0
        %629 = vmatprep.subr.mxu0 0.0
        %630 = vmatpush1.msra.mxu0 0.0
        %631 = vmatprep.subr.mxu0 0.0
        %632 = vmatpush1.msra.mxu0 0.0
        %633 = vmatprep.subr.mxu0 0.0
        %634 = vmatpush1.msra.mxu0 0.0
        %635 = vmatprep.subr.mxu0 0.0
        %636 = vmatpush1.msra.mxu0 0.0
        %637 = vmatprep.subr.mxu0 0.0
        %638 = vmatpush1.msra.mxu0 0.0
        %639 = vmatprep.subr.mxu0 0.0
        %640 = vmatpush1.msra.mxu0 0.0
        %641 = vmatprep.subr.mxu0 0.0
        %642 = vmatpush1.msra.mxu0 0.0
        %643 = vmatprep.subr.mxu0 0.0
        %644 = vmatpush1.msra.mxu0 0.0
        %645 = vmatprep.mubr.f32.mxu0 0.0
        %646 = vmatmul.mubr.f32.gmra.mrb[0].mxu0 %v531
        %v647 = vpop.f32.mrb[0].mxu0
        %v648 = vadd.f32 0.0, %v647
        %v649 = vpop.f32.mrb[0].mxu0
        %v650 = vadd.f32 0.0, %v649
        %651 = vmatprep.mubr.f32.mxu0 0.0
        %652 = vmatmul.mubr.f32.gmra.mrb[0].mxu0 %v532
        %v653 = vpop.f32.mrb[0].mxu0
        %v654 = vadd.f32 0.0, %v653
        %v655 = vpop.f32.mrb[0].mxu0
        %v656 = vadd.f32 0.0, %v655
        %657 = vdwg.mxu0
        %658 = vmatprep.subr.mxu0 0.0
        %659 = vmatpush1.msra.mxu0 %v535
        %660 = vmatprep.subr.mxu0 0.0
        %661 = vmatpush1.msra.mxu0 %v538
        %662 = vmatprep.subr.mxu0 0.0
        %663 = vmatpush1.msra.mxu0 %v541
        %664 = vmatprep.subr.mxu0 0.0
        %665 = vmatpush1.msra.mxu0 %v544
        %666 = vmatprep.subr.mxu0 0.0
        %667 = vmatpush1.msra.mxu0 %v547
        %668 = vmatprep.subr.mxu0 0.0
        %669 = vmatpush1.msra.mxu0 %v550
        %670 = vmatprep.subr.mxu0 0.0
        %671 = vmatpush1.msra.mxu0 %v553
        %672 = vmatprep.subr.mxu0 0.0
        %673 = vmatpush1.msra.mxu0 %v556
        %674 = vmatprep.subr.mxu0 0.0
        %675 = vmatpush1.msra.mxu0 %v559
        %676 = vmatprep.subr.mxu0 0.0
        %677 = vmatpush1.msra.mxu0 %v562
        %678 = vmatprep.subr.mxu0 0.0
        %679 = vmatpush1.msra.mxu0 %v565
        %680 = vmatprep.subr.mxu0 0.0
        %681 = vmatpush1.msra.mxu0 %v568
        %682 = vmatprep.subr.mxu0 0.0
        %683 = vmatpush1.msra.mxu0 %v571
        %684 = vmatprep.subr.mxu0 0.0
        %685 = vmatpush1.msra.mxu0 %v574
        %686 = vmatprep.subr.mxu0 0.0
        %687 = vmatpush1.msra.mxu0 %v577
        %688 = vmatprep.subr.mxu0 0.0
        %689 = vmatpush1.msra.mxu0 %v580
        %690 = vmatprep.subr.mxu0 0.0
        %691 = vmatpush1.msra.mxu0 0.0
        %692 = vmatprep.subr.mxu0 0.0
        %693 = vmatpush1.msra.mxu0 0.0
        %694 = vmatprep.subr.mxu0 0.0
        %695 = vmatpush1.msra.mxu0 0.0
        %696 = vmatprep.subr.mxu0 0.0
        %697 = vmatpush1.msra.mxu0 0.0
        %698 = vmatprep.subr.mxu0 0.0
        %699 = vmatpush1.msra.mxu0 0.0
        %700 = vmatprep.subr.mxu0 0.0
        %701 = vmatpush1.msra.mxu0 0.0
        %702 = vmatprep.subr.mxu0 0.0
        %703 = vmatpush1.msra.mxu0 0.0
        %704 = vmatprep.subr.mxu0 0.0
        %705 = vmatpush1.msra.mxu0 0.0
        %706 = vmatprep.subr.mxu0 0.0
        %707 = vmatpush1.msra.mxu0 0.0
        %708 = vmatprep.subr.mxu0 0.0
        %709 = vmatpush1.msra.mxu0 0.0
        %710 = vmatprep.subr.mxu0 0.0
        %711 = vmatpush1.msra.mxu0 0.0
        %712 = vmatprep.subr.mxu0 0.0
        %713 = vmatpush1.msra.mxu0 0.0
        %714 = vmatprep.subr.mxu0 0.0
        %715 = vmatpush1.msra.mxu0 0.0
        %716 = vmatprep.subr.mxu0 0.0
        %717 = vmatpush1.msra.mxu0 0.0
        %718 = vmatprep.subr.mxu0 0.0
        %719 = vmatpush1.msra.mxu0 0.0
        %720 = vmatprep.subr.mxu0 0.0
        %721 = vmatpush1.msra.mxu0 0.0
        %722 = vmatprep.mubr.f32.mxu0 0.0
        %723 = vmatmul.mubr.f32.gmra.mrb[0].mxu0 %v531
        %v724 = vpop.f32.mrb[0].mxu0
        %v725 = vadd.f32 0.0, %v724
        %v726 = vpop.f32.mrb[0].mxu0
        %727 = vmatprep.mubr.f32.mxu0 0.0
        %728 = vmatmul.mubr.f32.gmra.mrb[0].mxu0 %v532
        %v729 = vpop.f32.mrb[0].mxu0
        %v730 = vadd.f32 0.0, %v729
        %v731 = vpop.f32.mrb[0].mxu0
        %732 = vdwg.mxu0
        %735 = vrot.lane.b32.xlu0 %v648, 64
        %v736 = vpop.permute.xlu0 %735
        %737 = vrot.lane.b32.xlu0 %v654, 64
        %v738 = vpop.permute.xlu0 %737
        %v741 = vcombine.high %v648, 0.0
        %v743 = vunpack.c.l.s4 1983009808
        %v744 = vunpack.c.0.s8 %v743
        %v745 = vlaneseq
        %v746 = vshrl.u32 %v745, 7
        %v747 = vsub.s32 %v744, %v746
        %v748 = vrot.slane %v648, %v747
        %v750 = vunpack.c.l.s4 1983009808
        %v751 = vunpack.c.0.s8 %v750
        %v752 = vlaneseq
        %v753 = vshrl.u32 %v752, 7
        %v754 = vsub.s32 %v751, %v753
        %v755 = vrot.slane %v741, %v754
        %v756 = vcombine.high %v736, 0.0
        %v758 = vunpack.c.l.s4 1983009808
        %v759 = vunpack.c.0.s8 %v758
        %v760 = vlaneseq
        %v761 = vshrl.u32 %v760, 7
        %v762 = vsub.s32 %v759, %v761
        %v763 = vrot.slane %v736, %v762
        %v765 = vunpack.c.l.s4 1983009808
        %v766 = vunpack.c.0.s8 %v765
        %v767 = vlaneseq
        %v768 = vshrl.u32 %v767, 7
        %v769 = vsub.s32 %v766, %v768
        %v770 = vrot.slane %v756, %v769
        %v771 = vcombine.low %v748, %v763
        %v772 = vcombine.high %v748, %v763
        %v774 = vunpack.c.l.s4 1934713408
        %v775 = vunpack.c.0.s8 %v774
        %v776 = vlaneseq
        %v777 = vshrl.u32 %v776, 7
        %v778 = vsub.s32 %v775, %v777
        %v779 = vrot.slane %v771, %v778
        %v781 = vunpack.c.l.s4 1934713408
        %v782 = vunpack.c.0.s8 %v781
        %v783 = vlaneseq
        %v784 = vshrl.u32 %v783, 7
        %v785 = vsub.s32 %v782, %v784
        %v786 = vrot.slane %v772, %v785
        %v787 = vcombine.low %v755, %v770
        %v788 = vcombine.high %v755, %v770
        %v790 = vunpack.c.l.s4 1934713408
        %v791 = vunpack.c.0.s8 %v790
        %v792 = vlaneseq
        %v793 = vshrl.u32 %v792, 7
        %v794 = vsub.s32 %v791, %v793
        %v795 = vrot.slane %v787, %v794
        %v797 = vunpack.c.l.s4 1934713408
        %v798 = vunpack.c.0.s8 %v797
        %v799 = vlaneseq
        %v800 = vshrl.u32 %v799, 7
        %v801 = vsub.s32 %v798, %v800
        %v802 = vrot.slane %v788, %v801
        %v803 = vcombine.high %v779, 0.0
        %v804 = vcombine.high %v786, 0.0
        %v805 = vcombine.high %v795, 0.0
        %v806 = vcombine.high %v802, 0.0
        %v807 = vcombine.high %v654, 0.0
        %v809 = vunpack.c.l.s4 1983009808
        %v810 = vunpack.c.0.s8 %v809
        %v811 = vlaneseq
        %v812 = vshrl.u32 %v811, 7
        %v813 = vsub.s32 %v810, %v812
        %v814 = vrot.slane %v654, %v813
        %v816 = vunpack.c.l.s4 1983009808
        %v817 = vunpack.c.0.s8 %v816
        %v818 = vlaneseq
        %v819 = vshrl.u32 %v818, 7
        %v820 = vsub.s32 %v817, %v819
        %v821 = vrot.slane %v807, %v820
        %v822 = vcombine.high %v738, 0.0
        %v824 = vunpack.c.l.s4 1983009808
        %v825 = vunpack.c.0.s8 %v824
        %v826 = vlaneseq
        %v827 = vshrl.u32 %v826, 7
        %v828 = vsub.s32 %v825, %v827
        %v829 = vrot.slane %v738, %v828
        %v831 = vunpack.c.l.s4 1983009808
        %v832 = vunpack.c.0.s8 %v831
        %v833 = vlaneseq
        %v834 = vshrl.u32 %v833, 7
        %v835 = vsub.s32 %v832, %v834
        %v836 = vrot.slane %v822, %v835
        %v837 = vcombine.low %v814, %v829
        %v838 = vcombine.high %v814, %v829
        %v840 = vunpack.c.l.s4 1934713408
        %v841 = vunpack.c.0.s8 %v840
        %v842 = vlaneseq
        %v843 = vshrl.u32 %v842, 7
        %v844 = vsub.s32 %v841, %v843
        %v845 = vrot.slane %v837, %v844
        %v847 = vunpack.c.l.s4 1934713408
        %v848 = vunpack.c.0.s8 %v847
        %v849 = vlaneseq
        %v850 = vshrl.u32 %v849, 7
        %v851 = vsub.s32 %v848, %v850
        %v852 = vrot.slane %v838, %v851
        %v853 = vcombine.low %v821, %v836
        %v854 = vcombine.high %v821, %v836
        %v856 = vunpack.c.l.s4 1934713408
        %v857 = vunpack.c.0.s8 %v856
        %v858 = vlaneseq
        %v859 = vshrl.u32 %v858, 7
        %v860 = vsub.s32 %v857, %v859
        %v861 = vrot.slane %v853, %v860
        %v863 = vunpack.c.l.s4 1934713408
        %v864 = vunpack.c.0.s8 %v863
        %v865 = vlaneseq
        %v866 = vshrl.u32 %v865, 7
        %v867 = vsub.s32 %v864, %v866
        %v868 = vrot.slane %v854, %v867
        %v869 = vcombine.high %v845, 0.0
        %v870 = vcombine.high %v852, 0.0
        %v871 = vcombine.high %v861, 0.0
        %v872 = vcombine.high %v868, 0.0
        %v873 = vcombine.low %v779, %v786
        %v875 = vunpack.c.l.s4 1983009808
        %v876 = vunpack.c.0.s8 %v875
        %v877 = vlaneseq
        %v878 = vshrl.u32 %v877, 7
        %v879 = vsub.s32 %v876, %v878
        %v880 = vrot.slane %v873, %v879
        %v881 = vcombine.low %v803, %v804
        %v883 = vunpack.c.l.s4 1983009808
        %v884 = vunpack.c.0.s8 %v883
        %v885 = vlaneseq
        %v886 = vshrl.u32 %v885, 7
        %v887 = vsub.s32 %v884, %v886
        %v888 = vrot.slane %v881, %v887
        %v889 = vcombine.low %v795, %v802
        %v891 = vunpack.c.l.s4 1983009808
        %v892 = vunpack.c.0.s8 %v891
        %v893 = vlaneseq
        %v894 = vshrl.u32 %v893, 7
        %v895 = vsub.s32 %v892, %v894
        %v896 = vrot.slane %v889, %v895
        %v897 = vcombine.low %v805, %v806
        %v899 = vunpack.c.l.s4 1983009808
        %v900 = vunpack.c.0.s8 %v899
        %v901 = vlaneseq
        %v902 = vshrl.u32 %v901, 7
        %v903 = vsub.s32 %v900, %v902
        %v904 = vrot.slane %v897, %v903
        %v905 = vcombine.low %v880, %v888
        %v907 = vunpack.c.l.s4 1934713408
        %v908 = vunpack.c.0.s8 %v907
        %v909 = vlaneseq
        %v910 = vshrl.u32 %v909, 7
        %v911 = vsub.s32 %v908, %v910
        %v912 = vrot.slane %v905, %v911
        %v913 = vcombine.low %v896, %v904
        %v915 = vunpack.c.l.s4 1934713408
        %v916 = vunpack.c.0.s8 %v915
        %v917 = vlaneseq
        %v918 = vshrl.u32 %v917, 7
        %v919 = vsub.s32 %v916, %v918
        %v920 = vrot.slane %v913, %v919
        %v921 = vcombine.low %v912, %v920
        %v922 = vcombine.high %v912, %v920
        %v923 = vcombine.low %v845, %v852
        %v925 = vunpack.c.l.s4 1983009808
        %v926 = vunpack.c.0.s8 %v925
        %v927 = vlaneseq
        %v928 = vshrl.u32 %v927, 7
        %v929 = vsub.s32 %v926, %v928
        %v930 = vrot.slane %v923, %v929
        %v931 = vcombine.low %v869, %v870
        %v933 = vunpack.c.l.s4 1983009808
        %v934 = vunpack.c.0.s8 %v933
        %v935 = vlaneseq
        %v936 = vshrl.u32 %v935, 7
        %v937 = vsub.s32 %v934, %v936
        %v938 = vrot.slane %v931, %v937
        %v939 = vcombine.low %v861, %v868
        %v941 = vunpack.c.l.s4 1983009808
        %v942 = vunpack.c.0.s8 %v941
        %v943 = vlaneseq
        %v944 = vshrl.u32 %v943, 7
        %v945 = vsub.s32 %v942, %v944
        %v946 = vrot.slane %v939, %v945
        %v947 = vcombine.low %v871, %v872
        %v949 = vunpack.c.l.s4 1983009808
        %v950 = vunpack.c.0.s8 %v949
        %v951 = vlaneseq
        %v952 = vshrl.u32 %v951, 7
        %v953 = vsub.s32 %v950, %v952
        %v954 = vrot.slane %v947, %v953
        %v955 = vcombine.low %v930, %v938
        %v957 = vunpack.c.l.s4 1934713408
        %v958 = vunpack.c.0.s8 %v957
        %v959 = vlaneseq
        %v960 = vshrl.u32 %v959, 7
        %v961 = vsub.s32 %v958, %v960
        %v962 = vrot.slane %v955, %v961
        %v963 = vcombine.low %v946, %v954
        %v965 = vunpack.c.l.s4 1934713408
        %v966 = vunpack.c.0.s8 %v965
        %v967 = vlaneseq
        %v968 = vshrl.u32 %v967, 7
        %v969 = vsub.s32 %v966, %v968
        %v970 = vrot.slane %v963, %v969
        %v971 = vcombine.low %v962, %v970
        %v972 = vcombine.high %v962, %v970
        %975 = vrot.lane.b32.xlu0 %v650, 64
        %v976 = vpop.permute.xlu0 %975
        %977 = vrot.lane.b32.xlu0 %v656, 64
        %v978 = vpop.permute.xlu0 %977
        %v981 = vcombine.high %v650, 0.0
        %v983 = vunpack.c.l.s4 1983009808
        %v984 = vunpack.c.0.s8 %v983
        %v985 = vlaneseq
        %v986 = vshrl.u32 %v985, 7
        %v987 = vsub.s32 %v984, %v986
        %v988 = vrot.slane %v650, %v987
        %v990 = vunpack.c.l.s4 1983009808
        %v991 = vunpack.c.0.s8 %v990
        %v992 = vlaneseq
        %v993 = vshrl.u32 %v992, 7
        %v994 = vsub.s32 %v991, %v993
        %v995 = vrot.slane %v981, %v994
        %v996 = vcombine.high %v976, 0.0
        %v998 = vunpack.c.l.s4 1983009808
        %v999 = vunpack.c.0.s8 %v998
        %v1000 = vlaneseq
        %v1001 = vshrl.u32 %v1000, 7
        %v1002 = vsub.s32 %v999, %v1001
        %v1003 = vrot.slane %v976, %v1002
        %v1005 = vunpack.c.l.s4 1983009808
        %v1006 = vunpack.c.0.s8 %v1005
        %v1007 = vlaneseq
        %v1008 = vshrl.u32 %v1007, 7
        %v1009 = vsub.s32 %v1006, %v1008
        %v1010 = vrot.slane %v996, %v1009
        %v1011 = vcombine.low %v988, %v1003
        %v1012 = vcombine.high %v988, %v1003
        %v1014 = vunpack.c.l.s4 1934713408
        %v1015 = vunpack.c.0.s8 %v1014
        %v1016 = vlaneseq
        %v1017 = vshrl.u32 %v1016, 7
        %v1018 = vsub.s32 %v1015, %v1017
        %v1019 = vrot.slane %v1011, %v1018
        %v1021 = vunpack.c.l.s4 1934713408
        %v1022 = vunpack.c.0.s8 %v1021
        %v1023 = vlaneseq
        %v1024 = vshrl.u32 %v1023, 7
        %v1025 = vsub.s32 %v1022, %v1024
        %v1026 = vrot.slane %v1012, %v1025
        %v1027 = vcombine.low %v995, %v1010
        %v1028 = vcombine.high %v995, %v1010
        %v1030 = vunpack.c.l.s4 1934713408
        %v1031 = vunpack.c.0.s8 %v1030
        %v1032 = vlaneseq
        %v1033 = vshrl.u32 %v1032, 7
        %v1034 = vsub.s32 %v1031, %v1033
        %v1035 = vrot.slane %v1027, %v1034
        %v1037 = vunpack.c.l.s4 1934713408
        %v1038 = vunpack.c.0.s8 %v1037
        %v1039 = vlaneseq
        %v1040 = vshrl.u32 %v1039, 7
        %v1041 = vsub.s32 %v1038, %v1040
        %v1042 = vrot.slane %v1028, %v1041
        %v1043 = vcombine.high %v1019, 0.0
        %v1044 = vcombine.high %v1026, 0.0
        %v1045 = vcombine.high %v1035, 0.0
        %v1046 = vcombine.high %v1042, 0.0
        %v1047 = vcombine.high %v656, 0.0
        %v1049 = vunpack.c.l.s4 1983009808
        %v1050 = vunpack.c.0.s8 %v1049
        %v1051 = vlaneseq
        %v1052 = vshrl.u32 %v1051, 7
        %v1053 = vsub.s32 %v1050, %v1052
        %v1054 = vrot.slane %v656, %v1053
        %v1056 = vunpack.c.l.s4 1983009808
        %v1057 = vunpack.c.0.s8 %v1056
        %v1058 = vlaneseq
        %v1059 = vshrl.u32 %v1058, 7
        %v1060 = vsub.s32 %v1057, %v1059
        %v1061 = vrot.slane %v1047, %v1060
        %v1062 = vcombine.high %v978, 0.0
        %v1064 = vunpack.c.l.s4 1983009808
        %v1065 = vunpack.c.0.s8 %v1064
        %v1066 = vlaneseq
        %v1067 = vshrl.u32 %v1066, 7
        %v1068 = vsub.s32 %v1065, %v1067
        %v1069 = vrot.slane %v978, %v1068
        %v1071 = vunpack.c.l.s4 1983009808
        %v1072 = vunpack.c.0.s8 %v1071
        %v1073 = vlaneseq
        %v1074 = vshrl.u32 %v1073, 7
        %v1075 = vsub.s32 %v1072, %v1074
        %v1076 = vrot.slane %v1062, %v1075
        %v1077 = vcombine.low %v1054, %v1069
        %v1078 = vcombine.high %v1054, %v1069
        %v1080 = vunpack.c.l.s4 1934713408
        %v1081 = vunpack.c.0.s8 %v1080
        %v1082 = vlaneseq
        %v1083 = vshrl.u32 %v1082, 7
        %v1084 = vsub.s32 %v1081, %v1083
        %v1085 = vrot.slane %v1077, %v1084
        %v1087 = vunpack.c.l.s4 1934713408
        %v1088 = vunpack.c.0.s8 %v1087
        %v1089 = vlaneseq
        %v1090 = vshrl.u32 %v1089, 7
        %v1091 = vsub.s32 %v1088, %v1090
        %v1092 = vrot.slane %v1078, %v1091
        %v1093 = vcombine.low %v1061, %v1076
        %v1094 = vcombine.high %v1061, %v1076
        %v1096 = vunpack.c.l.s4 1934713408
        %v1097 = vunpack.c.0.s8 %v1096
        %v1098 = vlaneseq
        %v1099 = vshrl.u32 %v1098, 7
        %v1100 = vsub.s32 %v1097, %v1099
        %v1101 = vrot.slane %v1093, %v1100
        %v1103 = vunpack.c.l.s4 1934713408
        %v1104 = vunpack.c.0.s8 %v1103
        %v1105 = vlaneseq
        %v1106 = vshrl.u32 %v1105, 7
        %v1107 = vsub.s32 %v1104, %v1106
        %v1108 = vrot.slane %v1094, %v1107
        %v1109 = vcombine.high %v1085, 0.0
        %v1110 = vcombine.high %v1092, 0.0
        %v1111 = vcombine.high %v1101, 0.0
        %v1112 = vcombine.high %v1108, 0.0
        %v1113 = vcombine.low %v1019, %v1026
        %v1115 = vunpack.c.l.s4 1983009808
        %v1116 = vunpack.c.0.s8 %v1115
        %v1117 = vlaneseq
        %v1118 = vshrl.u32 %v1117, 7
        %v1119 = vsub.s32 %v1116, %v1118
        %v1120 = vrot.slane %v1113, %v1119
        %v1121 = vcombine.low %v1043, %v1044
        %v1123 = vunpack.c.l.s4 1983009808
        %v1124 = vunpack.c.0.s8 %v1123
        %v1125 = vlaneseq
        %v1126 = vshrl.u32 %v1125, 7
        %v1127 = vsub.s32 %v1124, %v1126
        %v1128 = vrot.slane %v1121, %v1127
        %v1129 = vcombine.low %v1035, %v1042
        %v1131 = vunpack.c.l.s4 1983009808
        %v1132 = vunpack.c.0.s8 %v1131
        %v1133 = vlaneseq
        %v1134 = vshrl.u32 %v1133, 7
        %v1135 = vsub.s32 %v1132, %v1134
        %v1136 = vrot.slane %v1129, %v1135
        %v1137 = vcombine.low %v1045, %v1046
        %v1139 = vunpack.c.l.s4 1983009808
        %v1140 = vunpack.c.0.s8 %v1139
        %v1141 = vlaneseq
        %v1142 = vshrl.u32 %v1141, 7
        %v1143 = vsub.s32 %v1140, %v1142
        %v1144 = vrot.slane %v1137, %v1143
        %v1145 = vcombine.low %v1120, %v1128
        %v1147 = vunpack.c.l.s4 1934713408
        %v1148 = vunpack.c.0.s8 %v1147
        %v1149 = vlaneseq
        %v1150 = vshrl.u32 %v1149, 7
        %v1151 = vsub.s32 %v1148, %v1150
        %v1152 = vrot.slane %v1145, %v1151
        %v1153 = vcombine.low %v1136, %v1144
        %v1155 = vunpack.c.l.s4 1934713408
        %v1156 = vunpack.c.0.s8 %v1155
        %v1157 = vlaneseq
        %v1158 = vshrl.u32 %v1157, 7
        %v1159 = vsub.s32 %v1156, %v1158
        %v1160 = vrot.slane %v1153, %v1159
        %v1161 = vcombine.low %v1152, %v1160
        %v1162 = vcombine.high %v1152, %v1160
        %v1163 = vcombine.low %v1085, %v1092
        %v1165 = vunpack.c.l.s4 1983009808
        %v1166 = vunpack.c.0.s8 %v1165
        %v1167 = vlaneseq
        %v1168 = vshrl.u32 %v1167, 7
        %v1169 = vsub.s32 %v1166, %v1168
        %v1170 = vrot.slane %v1163, %v1169
        %v1171 = vcombine.low %v1109, %v1110
        %v1173 = vunpack.c.l.s4 1983009808
        %v1174 = vunpack.c.0.s8 %v1173
        %v1175 = vlaneseq
        %v1176 = vshrl.u32 %v1175, 7
        %v1177 = vsub.s32 %v1174, %v1176
        %v1178 = vrot.slane %v1171, %v1177
        %v1179 = vcombine.low %v1101, %v1108
        %v1181 = vunpack.c.l.s4 1983009808
        %v1182 = vunpack.c.0.s8 %v1181
        %v1183 = vlaneseq
        %v1184 = vshrl.u32 %v1183, 7
        %v1185 = vsub.s32 %v1182, %v1184
        %v1186 = vrot.slane %v1179, %v1185
        %v1187 = vcombine.low %v1111, %v1112
        %v1189 = vunpack.c.l.s4 1983009808
        %v1190 = vunpack.c.0.s8 %v1189
        %v1191 = vlaneseq
        %v1192 = vshrl.u32 %v1191, 7
        %v1193 = vsub.s32 %v1190, %v1192
        %v1194 = vrot.slane %v1187, %v1193
        %v1195 = vcombine.low %v1170, %v1178
        %v1197 = vunpack.c.l.s4 1934713408
        %v1198 = vunpack.c.0.s8 %v1197
        %v1199 = vlaneseq
        %v1200 = vshrl.u32 %v1199, 7
        %v1201 = vsub.s32 %v1198, %v1200
        %v1202 = vrot.slane %v1195, %v1201
        %v1203 = vcombine.low %v1186, %v1194
        %v1205 = vunpack.c.l.s4 1934713408
        %v1206 = vunpack.c.0.s8 %v1205
        %v1207 = vlaneseq
        %v1208 = vshrl.u32 %v1207, 7
        %v1209 = vsub.s32 %v1206, %v1208
        %v1210 = vrot.slane %v1203, %v1209
        %v1211 = vcombine.low %v1202, %v1210
        %v1212 = vcombine.high %v1202, %v1210
        %1215 = vrot.lane.b32.xlu0 %v725, 64
        %v1216 = vpop.permute.xlu0 %1215
        %1217 = vrot.lane.b32.xlu0 %v730, 64
        %v1218 = vpop.permute.xlu0 %1217
        %v1221 = vcombine.high %v725, 0.0
        %v1223 = vunpack.c.l.s4 1983009808
        %v1224 = vunpack.c.0.s8 %v1223
        %v1225 = vlaneseq
        %v1226 = vshrl.u32 %v1225, 7
        %v1227 = vsub.s32 %v1224, %v1226
        %v1228 = vrot.slane %v725, %v1227
        %v1230 = vunpack.c.l.s4 1983009808
        %v1231 = vunpack.c.0.s8 %v1230
        %v1232 = vlaneseq
        %v1233 = vshrl.u32 %v1232, 7
        %v1234 = vsub.s32 %v1231, %v1233
        %v1235 = vrot.slane %v1221, %v1234
        %v1236 = vcombine.high %v1216, 0.0
        %v1238 = vunpack.c.l.s4 1983009808
        %v1239 = vunpack.c.0.s8 %v1238
        %v1240 = vlaneseq
        %v1241 = vshrl.u32 %v1240, 7
        %v1242 = vsub.s32 %v1239, %v1241
        %v1243 = vrot.slane %v1216, %v1242
        %v1245 = vunpack.c.l.s4 1983009808
        %v1246 = vunpack.c.0.s8 %v1245
        %v1247 = vlaneseq
        %v1248 = vshrl.u32 %v1247, 7
        %v1249 = vsub.s32 %v1246, %v1248
        %v1250 = vrot.slane %v1236, %v1249
        %v1251 = vcombine.low %v1228, %v1243
        %v1252 = vcombine.high %v1228, %v1243
        %v1254 = vunpack.c.l.s4 1934713408
        %v1255 = vunpack.c.0.s8 %v1254
        %v1256 = vlaneseq
        %v1257 = vshrl.u32 %v1256, 7
        %v1258 = vsub.s32 %v1255, %v1257
        %v1259 = vrot.slane %v1251, %v1258
        %v1261 = vunpack.c.l.s4 1934713408
        %v1262 = vunpack.c.0.s8 %v1261
        %v1263 = vlaneseq
        %v1264 = vshrl.u32 %v1263, 7
        %v1265 = vsub.s32 %v1262, %v1264
        %v1266 = vrot.slane %v1252, %v1265
        %v1267 = vcombine.low %v1235, %v1250
        %v1268 = vcombine.high %v1235, %v1250
        %v1270 = vunpack.c.l.s4 1934713408
        %v1271 = vunpack.c.0.s8 %v1270
        %v1272 = vlaneseq
        %v1273 = vshrl.u32 %v1272, 7
        %v1274 = vsub.s32 %v1271, %v1273
        %v1275 = vrot.slane %v1267, %v1274
        %v1277 = vunpack.c.l.s4 1934713408
        %v1278 = vunpack.c.0.s8 %v1277
        %v1279 = vlaneseq
        %v1280 = vshrl.u32 %v1279, 7
        %v1281 = vsub.s32 %v1278, %v1280
        %v1282 = vrot.slane %v1268, %v1281
        %v1283 = vcombine.high %v1259, 0.0
        %v1284 = vcombine.high %v1266, 0.0
        %v1285 = vcombine.high %v1275, 0.0
        %v1286 = vcombine.high %v1282, 0.0
        %v1287 = vcombine.high %v730, 0.0
        %v1289 = vunpack.c.l.s4 1983009808
        %v1290 = vunpack.c.0.s8 %v1289
        %v1291 = vlaneseq
        %v1292 = vshrl.u32 %v1291, 7
        %v1293 = vsub.s32 %v1290, %v1292
        %v1294 = vrot.slane %v730, %v1293
        %v1296 = vunpack.c.l.s4 1983009808
        %v1297 = vunpack.c.0.s8 %v1296
        %v1298 = vlaneseq
        %v1299 = vshrl.u32 %v1298, 7
        %v1300 = vsub.s32 %v1297, %v1299
        %v1301 = vrot.slane %v1287, %v1300
        %v1302 = vcombine.high %v1218, 0.0
        %v1304 = vunpack.c.l.s4 1983009808
        %v1305 = vunpack.c.0.s8 %v1304
        %v1306 = vlaneseq
        %v1307 = vshrl.u32 %v1306, 7
        %v1308 = vsub.s32 %v1305, %v1307
        %v1309 = vrot.slane %v1218, %v1308
        %v1311 = vunpack.c.l.s4 1983009808
        %v1312 = vunpack.c.0.s8 %v1311
        %v1313 = vlaneseq
        %v1314 = vshrl.u32 %v1313, 7
        %v1315 = vsub.s32 %v1312, %v1314
        %v1316 = vrot.slane %v1302, %v1315
        %v1317 = vcombine.low %v1294, %v1309
        %v1318 = vcombine.high %v1294, %v1309
        %v1320 = vunpack.c.l.s4 1934713408
        %v1321 = vunpack.c.0.s8 %v1320
        %v1322 = vlaneseq
        %v1323 = vshrl.u32 %v1322, 7
        %v1324 = vsub.s32 %v1321, %v1323
        %v1325 = vrot.slane %v1317, %v1324
        %v1327 = vunpack.c.l.s4 1934713408
        %v1328 = vunpack.c.0.s8 %v1327
        %v1329 = vlaneseq
        %v1330 = vshrl.u32 %v1329, 7
        %v1331 = vsub.s32 %v1328, %v1330
        %v1332 = vrot.slane %v1318, %v1331
        %v1333 = vcombine.low %v1301, %v1316
        %v1334 = vcombine.high %v1301, %v1316
        %v1336 = vunpack.c.l.s4 1934713408
        %v1337 = vunpack.c.0.s8 %v1336
        %v1338 = vlaneseq
        %v1339 = vshrl.u32 %v1338, 7
        %v1340 = vsub.s32 %v1337, %v1339
        %v1341 = vrot.slane %v1333, %v1340
        %v1343 = vunpack.c.l.s4 1934713408
        %v1344 = vunpack.c.0.s8 %v1343
        %v1345 = vlaneseq
        %v1346 = vshrl.u32 %v1345, 7
        %v1347 = vsub.s32 %v1344, %v1346
        %v1348 = vrot.slane %v1334, %v1347
        %v1349 = vcombine.high %v1325, 0.0
        %v1350 = vcombine.high %v1332, 0.0
        %v1351 = vcombine.high %v1341, 0.0
        %v1352 = vcombine.high %v1348, 0.0
        %v1353 = vcombine.low %v1259, %v1266
        %v1355 = vunpack.c.l.s4 1983009808
        %v1356 = vunpack.c.0.s8 %v1355
        %v1357 = vlaneseq
        %v1358 = vshrl.u32 %v1357, 7
        %v1359 = vsub.s32 %v1356, %v1358
        %v1360 = vrot.slane %v1353, %v1359
        %v1361 = vcombine.low %v1283, %v1284
        %v1363 = vunpack.c.l.s4 1983009808
        %v1364 = vunpack.c.0.s8 %v1363
        %v1365 = vlaneseq
        %v1366 = vshrl.u32 %v1365, 7
        %v1367 = vsub.s32 %v1364, %v1366
        %v1368 = vrot.slane %v1361, %v1367
        %v1369 = vcombine.low %v1275, %v1282
        %v1371 = vunpack.c.l.s4 1983009808
        %v1372 = vunpack.c.0.s8 %v1371
        %v1373 = vlaneseq
        %v1374 = vshrl.u32 %v1373, 7
        %v1375 = vsub.s32 %v1372, %v1374
        %v1376 = vrot.slane %v1369, %v1375
        %v1377 = vcombine.low %v1285, %v1286
        %v1379 = vunpack.c.l.s4 1983009808
        %v1380 = vunpack.c.0.s8 %v1379
        %v1381 = vlaneseq
        %v1382 = vshrl.u32 %v1381, 7
        %v1383 = vsub.s32 %v1380, %v1382
        %v1384 = vrot.slane %v1377, %v1383
        %v1385 = vcombine.low %v1360, %v1368
        %v1387 = vunpack.c.l.s4 1934713408
        %v1388 = vunpack.c.0.s8 %v1387
        %v1389 = vlaneseq
        %v1390 = vshrl.u32 %v1389, 7
        %v1391 = vsub.s32 %v1388, %v1390
        %v1392 = vrot.slane %v1385, %v1391
        %v1393 = vcombine.low %v1376, %v1384
        %v1395 = vunpack.c.l.s4 1934713408
        %v1396 = vunpack.c.0.s8 %v1395
        %v1397 = vlaneseq
        %v1398 = vshrl.u32 %v1397, 7
        %v1399 = vsub.s32 %v1396, %v1398
        %v1400 = vrot.slane %v1393, %v1399
        %v1401 = vcombine.low %v1392, %v1400
        %v1402 = vcombine.high %v1392, %v1400
        %v1403 = vcombine.low %v1325, %v1332
        %v1405 = vunpack.c.l.s4 1983009808
        %v1406 = vunpack.c.0.s8 %v1405
        %v1407 = vlaneseq
        %v1408 = vshrl.u32 %v1407, 7
        %v1409 = vsub.s32 %v1406, %v1408
        %v1410 = vrot.slane %v1403, %v1409
        %v1411 = vcombine.low %v1349, %v1350
        %v1413 = vunpack.c.l.s4 1983009808
        %v1414 = vunpack.c.0.s8 %v1413
        %v1415 = vlaneseq
        %v1416 = vshrl.u32 %v1415, 7
        %v1417 = vsub.s32 %v1414, %v1416
        %v1418 = vrot.slane %v1411, %v1417
        %v1419 = vcombine.low %v1341, %v1348
        %v1421 = vunpack.c.l.s4 1983009808
        %v1422 = vunpack.c.0.s8 %v1421
        %v1423 = vlaneseq
        %v1424 = vshrl.u32 %v1423, 7
        %v1425 = vsub.s32 %v1422, %v1424
        %v1426 = vrot.slane %v1419, %v1425
        %v1427 = vcombine.low %v1351, %v1352
        %v1429 = vunpack.c.l.s4 1983009808
        %v1430 = vunpack.c.0.s8 %v1429
        %v1431 = vlaneseq
        %v1432 = vshrl.u32 %v1431, 7
        %v1433 = vsub.s32 %v1430, %v1432
        %v1434 = vrot.slane %v1427, %v1433
        %v1435 = vcombine.low %v1410, %v1418
        %v1437 = vunpack.c.l.s4 1934713408
        %v1438 = vunpack.c.0.s8 %v1437
        %v1439 = vlaneseq
        %v1440 = vshrl.u32 %v1439, 7
        %v1441 = vsub.s32 %v1438, %v1440
        %v1442 = vrot.slane %v1435, %v1441
        %v1443 = vcombine.low %v1426, %v1434
        %v1445 = vunpack.c.l.s4 1934713408
        %v1446 = vunpack.c.0.s8 %v1445
        %v1447 = vlaneseq
        %v1448 = vshrl.u32 %v1447, 7
        %v1449 = vsub.s32 %v1446, %v1448
        %v1450 = vrot.slane %v1443, %v1449
        %v1451 = vcombine.low %v1442, %v1450
        %v1452 = vcombine.high %v1442, %v1450
        %vm1453 = vcmask 523264
        %v1455 = vsel %vm1453, %v921, 0
        %v1458 = vsel %vm1453, %v971, 0
        %v1461 = vsel %vm1453, %v1161, 0
        %v1464 = vsel %vm1453, %v1211, 0
        %1466 = vmatprep.subr.mxu0 0.0
        %1467 = vmatpush1.xpose.msra.mxu0 %v1461
        %1468 = vmatprep.subr.mxu0 0.0
        %1469 = vmatpush1.xpose.msra.mxu0 %v1464
        %1470 = vmatprep.subr.mxu0 0.0
        %1471 = vmatpush1.xpose.msra.mxu0 0.0
        %1472 = vmatprep.subr.mxu0 0.0
        %1473 = vmatpush1.xpose.msra.mxu0 0.0
        %1474 = vmatprep.subr.mxu0 0.0
        %1475 = vmatpush1.xpose.msra.mxu0 0.0
        %1476 = vmatprep.subr.mxu0 0.0
        %1477 = vmatpush1.xpose.msra.mxu0 0.0
        %1478 = vmatprep.subr.mxu0 0.0
        %1479 = vmatpush1.xpose.msra.mxu0 0.0
        %1480 = vmatprep.subr.mxu0 0.0
        %1481 = vmatpush1.xpose.msra.mxu0 0.0
        %1482 = vmatprep.subr.mxu0 0.0
        %1483 = vmatpush1.xpose.msra.mxu0 0.0
        %1484 = vmatprep.subr.mxu0 0.0
        %1485 = vmatpush1.xpose.msra.mxu0 0.0
        %1486 = vmatprep.subr.mxu0 0.0
        %1487 = vmatpush1.xpose.msra.mxu0 0.0
        %1488 = vmatprep.subr.mxu0 0.0
        %1489 = vmatpush1.xpose.msra.mxu0 0.0
        %1490 = vmatprep.subr.mxu0 0.0
        %1491 = vmatpush1.xpose.msra.mxu0 0.0
        %1492 = vmatprep.subr.mxu0 0.0
        %1493 = vmatpush1.xpose.msra.mxu0 0.0
        %1494 = vmatprep.subr.mxu0 0.0
        %1495 = vmatpush1.xpose.msra.mxu0 0.0
        %1496 = vmatprep.subr.mxu0 0.0
        %1497 = vmatpush1.xpose.msra.mxu0 0.0
        %1498 = vmatprep.subr.mxu0 0.0
        %1499 = vmatpush1.xpose.msra.mxu0 0.0
        %1500 = vmatprep.subr.mxu0 0.0
        %1501 = vmatpush1.xpose.msra.mxu0 0.0
        %1502 = vmatprep.subr.mxu0 0.0
        %1503 = vmatpush1.xpose.msra.mxu0 0.0
        %1504 = vmatprep.subr.mxu0 0.0
        %1505 = vmatpush1.xpose.msra.mxu0 0.0
        %1506 = vmatprep.subr.mxu0 0.0
        %1507 = vmatpush1.xpose.msra.mxu0 0.0
        %1508 = vmatprep.subr.mxu0 0.0
        %1509 = vmatpush1.xpose.msra.mxu0 0.0
        %1510 = vmatprep.subr.mxu0 0.0
        %1511 = vmatpush1.xpose.msra.mxu0 0.0
        %1512 = vmatprep.subr.mxu0 0.0
        %1513 = vmatpush1.xpose.msra.mxu0 0.0
        %1514 = vmatprep.subr.mxu0 0.0
        %1515 = vmatpush1.xpose.msra.mxu0 0.0
        %1516 = vmatprep.subr.mxu0 0.0
        %1517 = vmatpush1.xpose.msra.mxu0 0.0
        %1518 = vmatprep.subr.mxu0 0.0
        %1519 = vmatpush1.xpose.msra.mxu0 0.0
        %1520 = vmatprep.subr.mxu0 0.0
        %1521 = vmatpush1.xpose.msra.mxu0 0.0
        %1522 = vmatprep.subr.mxu0 0.0
        %1523 = vmatpush1.xpose.msra.mxu0 0.0
        %1524 = vmatprep.subr.mxu0 0.0
        %1525 = vmatpush1.xpose.msra.mxu0 0.0
        %1526 = vmatprep.subr.mxu0 0.0
        %1527 = vmatpush1.xpose.msra.mxu0 0.0
        %1528 = vmatprep.subr.mxu0 0.0
        %1529 = vmatpush1.xpose.msra.mxu0 0.0
        %1530 = vmatprep.mubr.f32.mxu0 0.0
        %1531 = vmatmul.mubr.f32.gmra.mrb[0].mxu0 %v1455
        %v1532 = vpop.f32.mrb[0].mxu0
        %v1533 = vadd.f32 0.0, %v1532
        %v1534 = vpop.f32.mrb[0].mxu0
        %1535 = vmatprep.mubr.f32.mxu0 0.0
        %1536 = vmatmul.mubr.f32.gmra.mrb[0].mxu0 %v1458
        %v1537 = vpop.f32.mrb[0].mxu0
        %v1538 = vadd.f32 0.0, %v1537
        %v1539 = vpop.f32.mrb[0].mxu0
        %1540 = vdwg.mxu0
        %v1542 = vsel %vm1453, %v922, 0
        %v1545 = vsel %vm1453, %v972, 0
        %v1548 = vsel %vm1453, %v1162, 0
        %v1551 = vsel %vm1453, %v1212, 0
        %1553 = vmatprep.subr.mxu0 0.0
        %1554 = vmatpush1.xpose.msra.mxu0 %v1548
        %1555 = vmatprep.subr.mxu0 0.0
        %1556 = vmatpush1.xpose.msra.mxu0 %v1551
        %1557 = vmatprep.subr.mxu0 0.0
        %1558 = vmatpush1.xpose.msra.mxu0 0.0
        %1559 = vmatprep.subr.mxu0 0.0
        %1560 = vmatpush1.xpose.msra.mxu0 0.0
        %1561 = vmatprep.subr.mxu0 0.0
        %1562 = vmatpush1.xpose.msra.mxu0 0.0
        %1563 = vmatprep.subr.mxu0 0.0
        %1564 = vmatpush1.xpose.msra.mxu0 0.0
        %1565 = vmatprep.subr.mxu0 0.0
        %1566 = vmatpush1.xpose.msra.mxu0 0.0
        %1567 = vmatprep.subr.mxu0 0.0
        %1568 = vmatpush1.xpose.msra.mxu0 0.0
        %1569 = vmatprep.subr.mxu0 0.0
        %1570 = vmatpush1.xpose.msra.mxu0 0.0
        %1571 = vmatprep.subr.mxu0 0.0
        %1572 = vmatpush1.xpose.msra.mxu0 0.0
        %1573 = vmatprep.subr.mxu0 0.0
        %1574 = vmatpush1.xpose.msra.mxu0 0.0
        %1575 = vmatprep.subr.mxu0 0.0
        %1576 = vmatpush1.xpose.msra.mxu0 0.0
        %1577 = vmatprep.subr.mxu0 0.0
        %1578 = vmatpush1.xpose.msra.mxu0 0.0
        %1579 = vmatprep.subr.mxu0 0.0
        %1580 = vmatpush1.xpose.msra.mxu0 0.0
        %1581 = vmatprep.subr.mxu0 0.0
        %1582 = vmatpush1.xpose.msra.mxu0 0.0
        %1583 = vmatprep.subr.mxu0 0.0
        %1584 = vmatpush1.xpose.msra.mxu0 0.0
        %1585 = vmatprep.subr.mxu0 0.0
        %1586 = vmatpush1.xpose.msra.mxu0 0.0
        %1587 = vmatprep.subr.mxu0 0.0
        %1588 = vmatpush1.xpose.msra.mxu0 0.0
        %1589 = vmatprep.subr.mxu0 0.0
        %1590 = vmatpush1.xpose.msra.mxu0 0.0
        %1591 = vmatprep.subr.mxu0 0.0
        %1592 = vmatpush1.xpose.msra.mxu0 0.0
        %1593 = vmatprep.subr.mxu0 0.0
        %1594 = vmatpush1.xpose.msra.mxu0 0.0
        %1595 = vmatprep.subr.mxu0 0.0
        %1596 = vmatpush1.xpose.msra.mxu0 0.0
        %1597 = vmatprep.subr.mxu0 0.0
        %1598 = vmatpush1.xpose.msra.mxu0 0.0
        %1599 = vmatprep.subr.mxu0 0.0
        %1600 = vmatpush1.xpose.msra.mxu0 0.0
        %1601 = vmatprep.subr.mxu0 0.0
        %1602 = vmatpush1.xpose.msra.mxu0 0.0
        %1603 = vmatprep.subr.mxu0 0.0
        %1604 = vmatpush1.xpose.msra.mxu0 0.0
        %1605 = vmatprep.subr.mxu0 0.0
        %1606 = vmatpush1.xpose.msra.mxu0 0.0
        %1607 = vmatprep.subr.mxu0 0.0
        %1608 = vmatpush1.xpose.msra.mxu0 0.0
        %1609 = vmatprep.subr.mxu0 0.0
        %1610 = vmatpush1.xpose.msra.mxu0 0.0
        %1611 = vmatprep.subr.mxu0 0.0
        %1612 = vmatpush1.xpose.msra.mxu0 0.0
        %1613 = vmatprep.subr.mxu0 0.0
        %1614 = vmatpush1.xpose.msra.mxu0 0.0
        %1615 = vmatprep.subr.mxu0 0.0
        %1616 = vmatpush1.xpose.msra.mxu0 0.0
        %1617 = vmatprep.mubr.f32.mxu0 0.0
        %1618 = vmatmul.mubr.f32.gmra.mrb[0].mxu0 %v1542
        %v1619 = vpop.f32.mrb[0].mxu0
        %v1620 = vadd.f32 0.0, %v1619
        %v1621 = vpop.f32.mrb[0].mxu0
        %1622 = vmatprep.mubr.f32.mxu0 0.0
        %1623 = vmatmul.mubr.f32.gmra.mrb[0].mxu0 %v1545
        %v1624 = vpop.f32.mrb[0].mxu0
        %v1625 = vadd.f32 0.0, %v1624
        %v1626 = vpop.f32.mrb[0].mxu0
        %1627 = vdwg.mxu0
        %v1628 = vlaneseq
        %v1629 = vshrl.u32 %v1628, 7
        %v1630 = vadd.s32 %v1629, 8
        %v1631 = vlaneseq
        %v1632 = vand.u32 %v1631, 127
        %vm1633 = vcmp.le.s32.totalorder %v1632, %v1629
        %vm1634 = vcmp.le.s32.totalorder %v1632, %v1630
        %v1635 = vsel %vm1633, 1, 0
        %v1636 = vsel %vm1634, 1, 0
        %vm1637 = vcmp.eq.s32.totalorder %v1635, 1
        %vm1638 = vcmp.eq.s32.totalorder %v1636, 1
        %v1639 = vsel %vm1637, %v1533, -1e+30
        %v1640 = vsel %vm1638, %v1538, -1e+30
        %v1641 = vsel %vm1637, %v1620, -1e+30
        %v1642 = vsel %vm1638, %v1625, -1e+30
        %vm1643 = vcmask 130048
        %v1644 = vsel %vm1643, %v1639, -inf
        %1645 = vmax.xlane.f32.xlu0 %v1644
        %v1646 = vpop.xlane.xlu0 %1645
        %v1647 = vsel %vm1643, %v1640, -inf
        %1648 = vmax.xlane.f32.xlu0 %v1647
        %v1649 = vpop.xlane.xlu0 %1648
        %v1650 = vsel %vm1643, %v1641, -inf
        %1651 = vmax.xlane.f32.xlu0 %v1650
        %v1652 = vpop.xlane.xlu0 %1651
        %v1653 = vsel %vm1643, %v1642, -inf
        %1654 = vmax.xlane.f32.xlu0 %v1653
        %v1655 = vpop.xlane.xlu0 %1654
        %v1656 = vsub.f32 %v1639, %v1646
        %v1657 = vsub.f32 %v1640, %v1649
        %v1658 = vsub.f32 %v1641, %v1652
        %v1659 = vsub.f32 %v1642, %v1655
        %v1660 = vmul.f32 %v1656, 1.442695
        %v1661 = vpow.pop %v1660
        %v1662 = vmul.f32 %v1657, 1.442695
        %v1663 = vpow.pop %v1662
        %v1664 = vmul.f32 %v1658, 1.442695
        %v1665 = vpow.pop %v1664
        %v1666 = vmul.f32 %v1659, 1.442695
        %v1667 = vpow.pop %v1666
        %v1668 = vsel %vm1643, %v1661, 0.0
        %1669 = vadd.xlane.f32.xlu0 %v1668
        %v1670 = vpop.xlane.xlu0 %1669
        %v1671 = vsel %vm1643, %v1663, 0.0
        %1672 = vadd.xlane.f32.xlu0 %v1671
        %v1673 = vpop.xlane.xlu0 %1672
        %v1674 = vsel %vm1643, %v1665, 0.0
        %1675 = vadd.xlane.f32.xlu0 %v1674
        %v1676 = vpop.xlane.xlu0 %1675
        %v1677 = vsel %vm1643, %v1667, 0.0
        %1678 = vadd.xlane.f32.xlu0 %v1677
        %v1679 = vpop.xlane.xlu0 %1678
        %v1681 = vsel %vm1643, %v1661, 0
        %v1684 = vsel %vm1643, %v1663, 0
        %1686 = vmatprep.subr.mxu0 0.0
        %1687 = vmatpush1.msra.mxu0 %v1401
        %1688 = vmatprep.subr.mxu0 0.0
        %1689 = vmatpush1.msra.mxu0 %v1451
        %1690 = vmatprep.subr.mxu0 0.0
        %1691 = vmatpush1.msra.mxu0 0.0
        %1692 = vmatprep.subr.mxu0 0.0
        %1693 = vmatpush1.msra.mxu0 0.0
        %1694 = vmatprep.subr.mxu0 0.0
        %1695 = vmatpush1.msra.mxu0 0.0
        %1696 = vmatprep.subr.mxu0 0.0
        %1697 = vmatpush1.msra.mxu0 0.0
        %1698 = vmatprep.subr.mxu0 0.0
        %1699 = vmatpush1.msra.mxu0 0.0
        %1700 = vmatprep.subr.mxu0 0.0
        %1701 = vmatpush1.msra.mxu0 0.0
        %1702 = vmatprep.subr.mxu0 0.0
        %1703 = vmatpush1.msra.mxu0 0.0
        %1704 = vmatprep.subr.mxu0 0.0
        %1705 = vmatpush1.msra.mxu0 0.0
        %1706 = vmatprep.subr.mxu0 0.0
        %1707 = vmatpush1.msra.mxu0 0.0
        %1708 = vmatprep.subr.mxu0 0.0
        %1709 = vmatpush1.msra.mxu0 0.0
        %1710 = vmatprep.subr.mxu0 0.0
        %1711 = vmatpush1.msra.mxu0 0.0
        %1712 = vmatprep.subr.mxu0 0.0
        %1713 = vmatpush1.msra.mxu0 0.0
        %1714 = vmatprep.subr.mxu0 0.0
        %1715 = vmatpush1.msra.mxu0 0.0
        %1716 = vmatprep.subr.mxu0 0.0
        %1717 = vmatpush1.msra.mxu0 0.0
        %1718 = vmatprep.subr.mxu0 0.0
        %1719 = vmatpush1.msra.mxu0 0.0
        %1720 = vmatprep.subr.mxu0 0.0
        %1721 = vmatpush1.msra.mxu0 0.0
        %1722 = vmatprep.subr.mxu0 0.0
        %1723 = vmatpush1.msra.mxu0 0.0
        %1724 = vmatprep.subr.mxu0 0.0
        %1725 = vmatpush1.msra.mxu0 0.0
        %1726 = vmatprep.subr.mxu0 0.0
        %1727 = vmatpush1.msra.mxu0 0.0
        %1728 = vmatprep.subr.mxu0 0.0
        %1729 = vmatpush1.msra.mxu0 0.0
        %1730 = vmatprep.subr.mxu0 0.0
        %1731 = vmatpush1.msra.mxu0 0.0
        %1732 = vmatprep.subr.mxu0 0.0
        %1733 = vmatpush1.msra.mxu0 0.0
        %1734 = vmatprep.subr.mxu0 0.0
        %1735 = vmatpush1.msra.mxu0 0.0
        %1736 = vmatprep.subr.mxu0 0.0
        %1737 = vmatpush1.msra.mxu0 0.0
        %1738 = vmatprep.subr.mxu0 0.0
        %1739 = vmatpush1.msra.mxu0 0.0
        %1740 = vmatprep.subr.mxu0 0.0
        %1741 = vmatpush1.msra.mxu0 0.0
        %1742 = vmatprep.subr.mxu0 0.0
        %1743 = vmatpush1.msra.mxu0 0.0
        %1744 = vmatprep.subr.mxu0 0.0
        %1745 = vmatpush1.msra.mxu0 0.0
        %1746 = vmatprep.subr.mxu0 0.0
        %1747 = vmatpush1.msra.mxu0 0.0
        %1748 = vmatprep.subr.mxu0 0.0
        %1749 = vmatpush1.msra.mxu0 0.0
        %1750 = vmatprep.mubr.f32.mxu0 0.0
        %1751 = vmatmul.mubr.f32.gmra.mrb[0].mxu0 %v1681
        %v1752 = vpop.f32.mrb[0].mxu0
        %v1753 = vadd.f32 0.0, %v1752
        %v1754 = vpop.f32.mrb[0].mxu0
        %1755 = vmatprep.mubr.f32.mxu0 0.0
        %1756 = vmatmul.mubr.f32.gmra.mrb[0].mxu0 %v1684
        %v1757 = vpop.f32.mrb[0].mxu0
        %v1758 = vadd.f32 0.0, %v1757
        %v1759 = vpop.f32.mrb[0].mxu0
        %1760 = vdwg.mxu0
        %v1762 = vsel %vm1643, %v1665, 0
        %v1765 = vsel %vm1643, %v1667, 0
        %1767 = vmatprep.subr.mxu0 0.0
        %1768 = vmatpush1.msra.mxu0 %v1402
        %1769 = vmatprep.subr.mxu0 0.0
        %1770 = vmatpush1.msra.mxu0 %v1452
        %1771 = vmatprep.subr.mxu0 0.0
        %1772 = vmatpush1.msra.mxu0 0.0
        %1773 = vmatprep.subr.mxu0 0.0
        %1774 = vmatpush1.msra.mxu0 0.0
        %1775 = vmatprep.subr.mxu0 0.0
        %1776 = vmatpush1.msra.mxu0 0.0
        %1777 = vmatprep.subr.mxu0 0.0
        %1778 = vmatpush1.msra.mxu0 0.0
        %1779 = vmatprep.subr.mxu0 0.0
        %1780 = vmatpush1.msra.mxu0 0.0
        %1781 = vmatprep.subr.mxu0 0.0
        %1782 = vmatpush1.msra.mxu0 0.0
        %1783 = vmatprep.subr.mxu0 0.0
        %1784 = vmatpush1.msra.mxu0 0.0
        %1785 = vmatprep.subr.mxu0 0.0
        %1786 = vmatpush1.msra.mxu0 0.0
        %1787 = vmatprep.subr.mxu0 0.0
        %1788 = vmatpush1.msra.mxu0 0.0
        %1789 = vmatprep.subr.mxu0 0.0
        %1790 = vmatpush1.msra.mxu0 0.0
        %1791 = vmatprep.subr.mxu0 0.0
        %1792 = vmatpush1.msra.mxu0 0.0
        %1793 = vmatprep.subr.mxu0 0.0
        %1794 = vmatpush1.msra.mxu0 0.0
        %1795 = vmatprep.subr.mxu0 0.0
        %1796 = vmatpush1.msra.mxu0 0.0
        %1797 = vmatprep.subr.mxu0 0.0
        %1798 = vmatpush1.msra.mxu0 0.0
        %1799 = vmatprep.subr.mxu0 0.0
        %1800 = vmatpush1.msra.mxu0 0.0
        %1801 = vmatprep.subr.mxu0 0.0
        %1802 = vmatpush1.msra.mxu0 0.0
        %1803 = vmatprep.subr.mxu0 0.0
        %1804 = vmatpush1.msra.mxu0 0.0
        %1805 = vmatprep.subr.mxu0 0.0
        %1806 = vmatpush1.msra.mxu0 0.0
        %1807 = vmatprep.subr.mxu0 0.0
        %1808 = vmatpush1.msra.mxu0 0.0
        %1809 = vmatprep.subr.mxu0 0.0
        %1810 = vmatpush1.msra.mxu0 0.0
        %1811 = vmatprep.subr.mxu0 0.0
        %1812 = vmatpush1.msra.mxu0 0.0
        %1813 = vmatprep.subr.mxu0 0.0
        %1814 = vmatpush1.msra.mxu0 0.0
        %1815 = vmatprep.subr.mxu0 0.0
        %1816 = vmatpush1.msra.mxu0 0.0
        %1817 = vmatprep.subr.mxu0 0.0
        %1818 = vmatpush1.msra.mxu0 0.0
        %1819 = vmatprep.subr.mxu0 0.0
        %1820 = vmatpush1.msra.mxu0 0.0
        %1821 = vmatprep.subr.mxu0 0.0
        %1822 = vmatpush1.msra.mxu0 0.0
        %1823 = vmatprep.subr.mxu0 0.0
        %1824 = vmatpush1.msra.mxu0 0.0
        %1825 = vmatprep.subr.mxu0 0.0
        %1826 = vmatpush1.msra.mxu0 0.0
        %1827 = vmatprep.subr.mxu0 0.0
        %1828 = vmatpush1.msra.mxu0 0.0
        %1829 = vmatprep.subr.mxu0 0.0
        %1830 = vmatpush1.msra.mxu0 0.0
        %1831 = vmatprep.mubr.f32.mxu0 0.0
        %1832 = vmatmul.mubr.f32.gmra.mrb[0].mxu0 %v1762
        %v1833 = vpop.f32.mrb[0].mxu0
        %v1834 = vadd.f32 0.0, %v1833
        %v1835 = vpop.f32.mrb[0].mxu0
        %1836 = vmatprep.mubr.f32.mxu0 0.0
        %1837 = vmatmul.mubr.f32.gmra.mrb[0].mxu0 %v1765
        %v1838 = vpop.f32.mrb[0].mxu0
        %v1839 = vadd.f32 0.0, %v1838
        %v1840 = vpop.f32.mrb[0].mxu0
        %1841 = vdwg.mxu0
        %v1842 = vrcp.pop %v1670
        %v1843 = vrcp.pop %v1673
        %v1844 = vrcp.pop %v1676
        %v1845 = vrcp.pop %v1679
        %v1846 = vmul.f32 %v1753, %v1842
        %v1847 = vmul.f32 %v1758, %v1843
        %v1848 = vmul.f32 %v1834, %v1844
        %v1849 = vmul.f32 %v1839, %v1845
        %v1850 = vcombine.high %v1846, 0.0
        %v1852 = vunpack.c.l.s4 1983009808
        %v1853 = vunpack.c.0.s8 %v1852
        %v1854 = vlaneseq
        %v1855 = vshrl.u32 %v1854, 7
        %v1856 = vsub.s32 %v1853, %v1855
        %v1857 = vrot.slane %v1846, %v1856
        %v1859 = vunpack.c.l.s4 1983009808
        %v1860 = vunpack.c.0.s8 %v1859
        %v1861 = vlaneseq
        %v1862 = vshrl.u32 %v1861, 7
        %v1863 = vsub.s32 %v1860, %v1862
        %v1864 = vrot.slane %v1850, %v1863
        %v1865 = vcombine.high %v1848, 0.0
        %v1867 = vunpack.c.l.s4 1983009808
        %v1868 = vunpack.c.0.s8 %v1867
        %v1869 = vlaneseq
        %v1870 = vshrl.u32 %v1869, 7
        %v1871 = vsub.s32 %v1868, %v1870
        %v1872 = vrot.slane %v1848, %v1871
        %v1874 = vunpack.c.l.s4 1983009808
        %v1875 = vunpack.c.0.s8 %v1874
        %v1876 = vlaneseq
        %v1877 = vshrl.u32 %v1876, 7
        %v1878 = vsub.s32 %v1875, %v1877
        %v1879 = vrot.slane %v1865, %v1878
        %v1880 = vcombine.low %v1857, %v1872
        %v1881 = vcombine.high %v1857, %v1872
        %v1883 = vunpack.c.l.s4 1934713408
        %v1884 = vunpack.c.0.s8 %v1883
        %v1885 = vlaneseq
        %v1886 = vshrl.u32 %v1885, 7
        %v1887 = vsub.s32 %v1884, %v1886
        %v1888 = vrot.slane %v1880, %v1887
        %v1890 = vunpack.c.l.s4 1934713408
        %v1891 = vunpack.c.0.s8 %v1890
        %v1892 = vlaneseq
        %v1893 = vshrl.u32 %v1892, 7
        %v1894 = vsub.s32 %v1891, %v1893
        %v1895 = vrot.slane %v1881, %v1894
        %v1896 = vcombine.low %v1864, %v1879
        %v1897 = vcombine.high %v1864, %v1879
        %v1899 = vunpack.c.l.s4 1934713408
        %v1900 = vunpack.c.0.s8 %v1899
        %v1901 = vlaneseq
        %v1902 = vshrl.u32 %v1901, 7
        %v1903 = vsub.s32 %v1900, %v1902
        %v1904 = vrot.slane %v1896, %v1903
        %v1906 = vunpack.c.l.s4 1934713408
        %v1907 = vunpack.c.0.s8 %v1906
        %v1908 = vlaneseq
        %v1909 = vshrl.u32 %v1908, 7
        %v1910 = vsub.s32 %v1907, %v1909
        %v1911 = vrot.slane %v1897, %v1910
        %v1912 = vcombine.high %v1888, 0.0
        %v1913 = vcombine.high %v1895, 0.0
        %v1914 = vcombine.high %v1904, 0.0
        %v1915 = vcombine.high %v1911, 0.0
        %v1916 = vcombine.high %v1847, 0.0
        %v1918 = vunpack.c.l.s4 1983009808
        %v1919 = vunpack.c.0.s8 %v1918
        %v1920 = vlaneseq
        %v1921 = vshrl.u32 %v1920, 7
        %v1922 = vsub.s32 %v1919, %v1921
        %v1923 = vrot.slane %v1847, %v1922
        %v1925 = vunpack.c.l.s4 1983009808
        %v1926 = vunpack.c.0.s8 %v1925
        %v1927 = vlaneseq
        %v1928 = vshrl.u32 %v1927, 7
        %v1929 = vsub.s32 %v1926, %v1928
        %v1930 = vrot.slane %v1916, %v1929
        %v1931 = vcombine.high %v1849, 0.0
        %v1933 = vunpack.c.l.s4 1983009808
        %v1934 = vunpack.c.0.s8 %v1933
        %v1935 = vlaneseq
        %v1936 = vshrl.u32 %v1935, 7
        %v1937 = vsub.s32 %v1934, %v1936
        %v1938 = vrot.slane %v1849, %v1937
        %v1940 = vunpack.c.l.s4 1983009808
        %v1941 = vunpack.c.0.s8 %v1940
        %v1942 = vlaneseq
        %v1943 = vshrl.u32 %v1942, 7
        %v1944 = vsub.s32 %v1941, %v1943
        %v1945 = vrot.slane %v1931, %v1944
        %v1946 = vcombine.low %v1923, %v1938
        %v1947 = vcombine.high %v1923, %v1938
        %v1949 = vunpack.c.l.s4 1934713408
        %v1950 = vunpack.c.0.s8 %v1949
        %v1951 = vlaneseq
        %v1952 = vshrl.u32 %v1951, 7
        %v1953 = vsub.s32 %v1950, %v1952
        %v1954 = vrot.slane %v1946, %v1953
        %v1956 = vunpack.c.l.s4 1934713408
        %v1957 = vunpack.c.0.s8 %v1956
        %v1958 = vlaneseq
        %v1959 = vshrl.u32 %v1958, 7
        %v1960 = vsub.s32 %v1957, %v1959
        %v1961 = vrot.slane %v1947, %v1960
        %v1962 = vcombine.low %v1930, %v1945
        %v1963 = vcombine.high %v1930, %v1945
        %v1965 = vunpack.c.l.s4 1934713408
        %v1966 = vunpack.c.0.s8 %v1965
        %v1967 = vlaneseq
        %v1968 = vshrl.u32 %v1967, 7
        %v1969 = vsub.s32 %v1966, %v1968
        %v1970 = vrot.slane %v1962, %v1969
        %v1972 = vunpack.c.l.s4 1934713408
        %v1973 = vunpack.c.0.s8 %v1972
        %v1974 = vlaneseq
        %v1975 = vshrl.u32 %v1974, 7
        %v1976 = vsub.s32 %v1973, %v1975
        %v1977 = vrot.slane %v1963, %v1976
        %v1978 = vcombine.high %v1954, 0.0
        %v1979 = vcombine.high %v1961, 0.0
        %v1980 = vcombine.high %v1970, 0.0
        %v1981 = vcombine.high %v1977, 0.0
        %v1982 = vcombine.low %v1888, %v1895
        %v1984 = vunpack.c.l.s4 1983009808
        %v1985 = vunpack.c.0.s8 %v1984
        %v1986 = vlaneseq
        %v1987 = vshrl.u32 %v1986, 7
        %v1988 = vsub.s32 %v1985, %v1987
        %v1989 = vrot.slane %v1982, %v1988
        %v1990 = vcombine.low %v1912, %v1913
        %v1992 = vunpack.c.l.s4 1983009808
        %v1993 = vunpack.c.0.s8 %v1992
        %v1994 = vlaneseq
        %v1995 = vshrl.u32 %v1994, 7
        %v1996 = vsub.s32 %v1993, %v1995
        %v1997 = vrot.slane %v1990, %v1996
        %v1998 = vcombine.low %v1904, %v1911
        %v2000 = vunpack.c.l.s4 1983009808
        %v2001 = vunpack.c.0.s8 %v2000
        %v2002 = vlaneseq
        %v2003 = vshrl.u32 %v2002, 7
        %v2004 = vsub.s32 %v2001, %v2003
        %v2005 = vrot.slane %v1998, %v2004
        %v2006 = vcombine.low %v1914, %v1915
        %v2008 = vunpack.c.l.s4 1983009808
        %v2009 = vunpack.c.0.s8 %v2008
        %v2010 = vlaneseq
        %v2011 = vshrl.u32 %v2010, 7
        %v2012 = vsub.s32 %v2009, %v2011
        %v2013 = vrot.slane %v2006, %v2012
        %v2014 = vcombine.low %v1989, %v1997
        %v2016 = vunpack.c.l.s4 1934713408
        %v2017 = vunpack.c.0.s8 %v2016
        %v2018 = vlaneseq
        %v2019 = vshrl.u32 %v2018, 7
        %v2020 = vsub.s32 %v2017, %v2019
        %v2021 = vrot.slane %v2014, %v2020
        %v2022 = vcombine.low %v2005, %v2013
        %v2024 = vunpack.c.l.s4 1934713408
        %v2025 = vunpack.c.0.s8 %v2024
        %v2026 = vlaneseq
        %v2027 = vshrl.u32 %v2026, 7
        %v2028 = vsub.s32 %v2025, %v2027
        %v2029 = vrot.slane %v2022, %v2028
        %v2030 = vcombine.low %v2021, %v2029
        %v2031 = vcombine.high %v2021, %v2029
        %v2032 = vcombine.low %v1954, %v1961
        %v2034 = vunpack.c.l.s4 1983009808
        %v2035 = vunpack.c.0.s8 %v2034
        %v2036 = vlaneseq
        %v2037 = vshrl.u32 %v2036, 7
        %v2038 = vsub.s32 %v2035, %v2037
        %v2039 = vrot.slane %v2032, %v2038
        %v2040 = vcombine.low %v1978, %v1979
        %v2042 = vunpack.c.l.s4 1983009808
        %v2043 = vunpack.c.0.s8 %v2042
        %v2044 = vlaneseq
        %v2045 = vshrl.u32 %v2044, 7
        %v2046 = vsub.s32 %v2043, %v2045
        %v2047 = vrot.slane %v2040, %v2046
        %v2048 = vcombine.low %v1970, %v1977
        %v2050 = vunpack.c.l.s4 1983009808
        %v2051 = vunpack.c.0.s8 %v2050
        %v2052 = vlaneseq
        %v2053 = vshrl.u32 %v2052, 7
        %v2054 = vsub.s32 %v2051, %v2053
        %v2055 = vrot.slane %v2048, %v2054
        %v2056 = vcombine.low %v1980, %v1981
        %v2058 = vunpack.c.l.s4 1983009808
        %v2059 = vunpack.c.0.s8 %v2058
        %v2060 = vlaneseq
        %v2061 = vshrl.u32 %v2060, 7
        %v2062 = vsub.s32 %v2059, %v2061
        %v2063 = vrot.slane %v2056, %v2062
        %v2064 = vcombine.low %v2039, %v2047
        %v2066 = vunpack.c.l.s4 1934713408
        %v2067 = vunpack.c.0.s8 %v2066
        %v2068 = vlaneseq
        %v2069 = vshrl.u32 %v2068, 7
        %v2070 = vsub.s32 %v2067, %v2069
        %v2071 = vrot.slane %v2064, %v2070
        %v2072 = vcombine.low %v2055, %v2063
        %v2074 = vunpack.c.l.s4 1934713408
        %v2075 = vunpack.c.0.s8 %v2074
        %v2076 = vlaneseq
        %v2077 = vshrl.u32 %v2076, 7
        %v2078 = vsub.s32 %v2075, %v2077
        %v2079 = vrot.slane %v2072, %v2078
        %v2080 = vcombine.low %v2071, %v2079
        %v2081 = vcombine.high %v2071, %v2079
        %2084 = vrot.lane.b32.xlu0 %v2031, 64
        %v2085 = vpop.permute.xlu0 %2084
        %2086 = vrot.lane.b32.xlu0 %v2081, 64
        %v2087 = vpop.permute.xlu0 %2086
        %v2090 = vsel %vm1453, %v2030, %v2085
        %v2091 = vsel %vm1453, %v2080, %v2087
        %v2092 = vld [vmem:[#allocation7] sm:$0xff]
        %v2093 = vld [vmem:[#allocation7 + $0x8] sm:$0xff]
        %v2094 = vld [vmem:[#allocation7 + $0x10] sm:$0xff]
        %v2095 = vld [vmem:[#allocation7 + $0x18] sm:$0xff]
        %v2096 = vld [vmem:[#allocation7 + $0x20] sm:$0xff]
        %v2097 = vld [vmem:[#allocation7 + $0x28] sm:$0xff]
        %v2098 = vld [vmem:[#allocation7 + $0x30] sm:$0xff]
        %v2099 = vld [vmem:[#allocation7 + $0x38] sm:$0xff]
        %v2100 = vld [vmem:[#allocation7 + $0x40] sm:$0xff]
        %v2101 = vld [vmem:[#allocation7 + $0x48] sm:$0xff]
        %v2102 = vld [vmem:[#allocation7 + $0x50] sm:$0xff]
        %v2103 = vld [vmem:[#allocation7 + $0x58] sm:$0xff]
        %v2104 = vld [vmem:[#allocation7 + $0x60] sm:$0xff]
        %v2105 = vld [vmem:[#allocation7 + $0x68] sm:$0xff]
        %v2106 = vld [vmem:[#allocation7 + $0x70] sm:$0xff]
        %v2107 = vld [vmem:[#allocation7 + $0x78] sm:$0xff]
        %v2108 = vld [vmem:[%s5] sm:$0x1]
        %v2110 = vlaneseq
        %v2111 = vshrl.u32 %v2110, 7
        %v2112 = vsub.s32 0, %v2111
        %v2113 = vrot.slane %v2108, %v2112
        %2115 = vmatprep.subr.mxu0 0.0
        %2116 = vmatpush1.msra.mxu0 %v2092
        %2117 = vmatprep.subr.mxu0 0.0
        %2118 = vmatpush1.msra.mxu0 %v2093
        %2119 = vmatprep.subr.mxu0 0.0
        %2120 = vmatpush1.msra.mxu0 %v2094
        %2121 = vmatprep.subr.mxu0 0.0
        %2122 = vmatpush1.msra.mxu0 %v2095
        %2123 = vmatprep.subr.mxu0 0.0
        %2124 = vmatpush1.msra.mxu0 %v2096
        %2125 = vmatprep.subr.mxu0 0.0
        %2126 = vmatpush1.msra.mxu0 %v2097
        %2127 = vmatprep.subr.mxu0 0.0
        %2128 = vmatpush1.msra.mxu0 %v2098
        %2129 = vmatprep.subr.mxu0 0.0
        %2130 = vmatpush1.msra.mxu0 %v2099
        %2131 = vmatprep.subr.mxu0 0.0
        %2132 = vmatpush1.msra.mxu0 %v2100
        %2133 = vmatprep.subr.mxu0 0.0
        %2134 = vmatpush1.msra.mxu0 %v2101
        %2135 = vmatprep.subr.mxu0 0.0
        %2136 = vmatpush1.msra.mxu0 %v2102
        %2137 = vmatprep.subr.mxu0 0.0
        %2138 = vmatpush1.msra.mxu0 %v2103
        %2139 = vmatprep.subr.mxu0 0.0
        %2140 = vmatpush1.msra.mxu0 %v2104
        %2141 = vmatprep.subr.mxu0 0.0
        %2142 = vmatpush1.msra.mxu0 %v2105
        %2143 = vmatprep.subr.mxu0 0.0
        %2144 = vmatpush1.msra.mxu0 %v2106
        %2145 = vmatprep.subr.mxu0 0.0
        %2146 = vmatpush1.msra.mxu0 %v2107
        %2147 = vmatprep.subr.mxu0 0.0
        %2148 = vmatpush1.msra.mxu0 0.0
        %2149 = vmatprep.subr.mxu0 0.0
        %2150 = vmatpush1.msra.mxu0 0.0
        %2151 = vmatprep.subr.mxu0 0.0
        %2152 = vmatpush1.msra.mxu0 0.0
        %2153 = vmatprep.subr.mxu0 0.0
        %2154 = vmatpush1.msra.mxu0 0.0
        %2155 = vmatprep.subr.mxu0 0.0
        %2156 = vmatpush1.msra.mxu0 0.0
        %2157 = vmatprep.subr.mxu0 0.0
        %2158 = vmatpush1.msra.mxu0 0.0
        %2159 = vmatprep.subr.mxu0 0.0
        %2160 = vmatpush1.msra.mxu0 0.0
        %2161 = vmatprep.subr.mxu0 0.0
        %2162 = vmatpush1.msra.mxu0 0.0
        %2163 = vmatprep.subr.mxu0 0.0
        %2164 = vmatpush1.msra.mxu0 0.0
        %2165 = vmatprep.subr.mxu0 0.0
        %2166 = vmatpush1.msra.mxu0 0.0
        %2167 = vmatprep.subr.mxu0 0.0
        %2168 = vmatpush1.msra.mxu0 0.0
        %2169 = vmatprep.subr.mxu0 0.0
        %2170 = vmatpush1.msra.mxu0 0.0
        %2171 = vmatprep.subr.mxu0 0.0
        %2172 = vmatpush1.msra.mxu0 0.0
        %2173 = vmatprep.subr.mxu0 0.0
        %2174 = vmatpush1.msra.mxu0 0.0
        %2175 = vmatprep.subr.mxu0 0.0
        %2176 = vmatpush1.msra.mxu0 0.0
        %2177 = vmatprep.subr.mxu0 0.0
        %2178 = vmatpush1.msra.mxu0 0.0
        %2179 = vmatprep.mubr.f32.mxu0 0.0
        %2180 = vmatmul.mubr.f32.gmra.mrb[0].mxu0 %v2090
        %v2181 = vpop.f32.mrb[0].mxu0
        %v2182 = vadd.f32 %v2113, %v2181
        %v2183 = vpop.f32.mrb[0].mxu0
        %2184 = vmatprep.mubr.f32.mxu0 0.0
        %2185 = vmatmul.mubr.f32.gmra.mrb[0].mxu0 %v2091
        %v2186 = vpop.f32.mrb[0].mxu0
        %v2187 = vadd.f32 %v2113, %v2186
        %v2188 = vpop.f32.mrb[0].mxu0
        %2189 = vdwg.mxu0
        %v2190 = vadd.f32 %v490, %v2182
        %v2191 = vadd.f32 %v491, %v2187
        %v2192 = vld [vmem:[%s6] sm:$0x1]
        %v2193 = vld [vmem:[%s7] sm:$0x1]
        %2194 = vadd.xlane.f32.xlu0 %v2190
        %v2195 = vpop.xlane.xlu0 %2194
        %2196 = vadd.xlane.f32.xlu0 %v2191
        %v2197 = vpop.xlane.xlu0 %2196
        %v2198 = vmul.f32 %v2195, %v498
        %v2199 = vmul.f32 %v2197, %v498
        %v2200 = vsub.f32 %v2190, %v2198
        %v2201 = vsub.f32 %v2191, %v2199
        %v2202 = vmul.f32 %v2200, %v2200
        %v2203 = vmul.f32 %v2201, %v2201
        %2204 = vadd.xlane.f32.xlu0 %v2202
        %v2205 = vpop.xlane.xlu0 %2204
        %2206 = vadd.xlane.f32.xlu0 %v2203
        %v2207 = vpop.xlane.xlu0 %2206
        %v2208 = vmul.f32 %v2205, %v498
        %v2209 = vmul.f32 %v2207, %v498
        %v2210 = vadd.f32 %v2208, 1e-05
        %v2211 = vadd.f32 %v2209, 1e-05
        %v2212 = vrsqrt.pop %v2210
        %v2213 = vrsqrt.pop %v2211
        %v2214 = vmul.f32 %v2200, %v2212
        %v2215 = vmul.f32 %v2201, %v2213
        %v2217 = vlaneseq
        %v2218 = vshrl.u32 %v2217, 7
        %v2219 = vsub.s32 0, %v2218
        %v2220 = vrot.slane %v2192, %v2219
        %v2222 = vmul.f32 %v2214, %v2220
        %v2223 = vmul.f32 %v2215, %v2220
        %v2225 = vlaneseq
        %v2226 = vshrl.u32 %v2225, 7
        %v2227 = vsub.s32 0, %v2226
        %v2228 = vrot.slane %v2193, %v2227
        %v2230 = vadd.f32 %v2222, %v2228
        %v2231 = vadd.f32 %v2223, %v2228
        %v2232 = vld [vmem:[#allocation8] sm:$0xff]
        %v2233 = vld [vmem:[#allocation8 + $0x8] sm:$0xff]
        %v2234 = vld [vmem:[#allocation8 + $0x10] sm:$0xff]
        %v2235 = vld [vmem:[#allocation8 + $0x18] sm:$0xff]
        %v2236 = vld [vmem:[#allocation8 + $0x20] sm:$0xff]
        %v2237 = vld [vmem:[#allocation8 + $0x28] sm:$0xff]
        %v2238 = vld [vmem:[#allocation8 + $0x30] sm:$0xff]
        %v2239 = vld [vmem:[#allocation8 + $0x38] sm:$0xff]
        %v2240 = vld [vmem:[#allocation8 + $0x40] sm:$0xff]
        %v2241 = vld [vmem:[#allocation8 + $0x48] sm:$0xff]
        %v2242 = vld [vmem:[#allocation8 + $0x50] sm:$0xff]
        %v2243 = vld [vmem:[#allocation8 + $0x58] sm:$0xff]
        %v2244 = vld [vmem:[#allocation8 + $0x60] sm:$0xff]
        %v2245 = vld [vmem:[#allocation8 + $0x68] sm:$0xff]
        %v2246 = vld [vmem:[#allocation8 + $0x70] sm:$0xff]
        %v2247 = vld [vmem:[#allocation8 + $0x78] sm:$0xff]
        %v2248 = vld [vmem:[#allocation8 + $0x80] sm:$0xff]
        %v2249 = vld [vmem:[#allocation8 + $0x88] sm:$0xff]
        %v2250 = vld [vmem:[#allocation8 + $0x90] sm:$0xff]
        %v2251 = vld [vmem:[#allocation8 + $0x98] sm:$0xff]
        %v2252 = vld [vmem:[#allocation8 + $0xa0] sm:$0xff]
        %v2253 = vld [vmem:[#allocation8 + $0xa8] sm:$0xff]
        %v2254 = vld [vmem:[#allocation8 + $0xb0] sm:$0xff]
        %v2255 = vld [vmem:[#allocation8 + $0xb8] sm:$0xff]
        %v2256 = vld [vmem:[#allocation8 + $0xc0] sm:$0xff]
        %v2257 = vld [vmem:[#allocation8 + $0xc8] sm:$0xff]
        %v2258 = vld [vmem:[#allocation8 + $0xd0] sm:$0xff]
        %v2259 = vld [vmem:[#allocation8 + $0xd8] sm:$0xff]
        %v2260 = vld [vmem:[#allocation8 + $0xe0] sm:$0xff]
        %v2261 = vld [vmem:[#allocation8 + $0xe8] sm:$0xff]
        %v2262 = vld [vmem:[#allocation8 + $0xf0] sm:$0xff]
        %v2263 = vld [vmem:[#allocation8 + $0xf8] sm:$0xff]
        %v2264 = vld [vmem:[#allocation8 + $0x100] sm:$0xff]
        %v2265 = vld [vmem:[#allocation8 + $0x108] sm:$0xff]
        %v2266 = vld [vmem:[#allocation8 + $0x110] sm:$0xff]
        %v2267 = vld [vmem:[#allocation8 + $0x118] sm:$0xff]
        %v2268 = vld [vmem:[#allocation8 + $0x120] sm:$0xff]
        %v2269 = vld [vmem:[#allocation8 + $0x128] sm:$0xff]
        %v2270 = vld [vmem:[#allocation8 + $0x130] sm:$0xff]
        %v2271 = vld [vmem:[#allocation8 + $0x138] sm:$0xff]
        %v2272 = vld [vmem:[#allocation8 + $0x140] sm:$0xff]
        %v2273 = vld [vmem:[#allocation8 + $0x148] sm:$0xff]
        %v2274 = vld [vmem:[#allocation8 + $0x150] sm:$0xff]
        %v2275 = vld [vmem:[#allocation8 + $0x158] sm:$0xff]
        %v2276 = vld [vmem:[#allocation8 + $0x160] sm:$0xff]
        %v2277 = vld [vmem:[#allocation8 + $0x168] sm:$0xff]
        %v2278 = vld [vmem:[#allocation8 + $0x170] sm:$0xff]
        %v2279 = vld [vmem:[#allocation8 + $0x178] sm:$0xff]
        %v2280 = vld [vmem:[#allocation8 + $0x180] sm:$0xff]
        %v2281 = vld [vmem:[#allocation8 + $0x188] sm:$0xff]
        %v2282 = vld [vmem:[#allocation8 + $0x190] sm:$0xff]
        %v2283 = vld [vmem:[#allocation8 + $0x198] sm:$0xff]
        %v2284 = vld [vmem:[#allocation8 + $0x1a0] sm:$0xff]
        %v2285 = vld [vmem:[#allocation8 + $0x1a8] sm:$0xff]
        %v2286 = vld [vmem:[#allocation8 + $0x1b0] sm:$0xff]
        %v2287 = vld [vmem:[#allocation8 + $0x1b8] sm:$0xff]
        %v2288 = vld [vmem:[#allocation8 + $0x1c0] sm:$0xff]
        %v2289 = vld [vmem:[#allocation8 + $0x1c8] sm:$0xff]
        %v2290 = vld [vmem:[#allocation8 + $0x1d0] sm:$0xff]
        %v2291 = vld [vmem:[#allocation8 + $0x1d8] sm:$0xff]
        %v2292 = vld [vmem:[#allocation8 + $0x1e0] sm:$0xff]
        %v2293 = vld [vmem:[#allocation8 + $0x1e8] sm:$0xff]
        %v2294 = vld [vmem:[#allocation8 + $0x1f0] sm:$0xff]
        %v2295 = vld [vmem:[#allocation8 + $0x1f8] sm:$0xff]
        %v2296 = vld [vmem:[%s9] sm:$0xf]
        %v2298 = vlaneseq
        %v2299 = vshrl.u32 %v2298, 7
        %v2300 = vsub.s32 0, %v2299
        %v2301 = vrot.slane %v2296, %v2300
        %v2302 = vlaneseq
        %v2303 = vshrl.u32 %v2302, 7
        %v2304 = vsub.s32 1, %v2303
        %v2305 = vrot.slane %v2296, %v2304
        %v2306 = vlaneseq
        %v2307 = vshrl.u32 %v2306, 7
        %v2308 = vsub.s32 2, %v2307
        %v2309 = vrot.slane %v2296, %v2308
        %v2310 = vlaneseq
        %v2311 = vshrl.u32 %v2310, 7
        %v2312 = vsub.s32 3, %v2311
        %v2313 = vrot.slane %v2296, %v2312
        %2318 = vmatprep.subr.mxu0 %v2233
        %2319 = vmatpush1.msra.mxu0 %v2232
        %2320 = vmatprep.subr.mxu0 %v2237
        %2321 = vmatpush1.msra.mxu0 %v2236
        %2322 = vmatprep.subr.mxu0 %v2241
        %2323 = vmatpush1.msra.mxu0 %v2240
        %2324 = vmatprep.subr.mxu0 %v2245
        %2325 = vmatpush1.msra.mxu0 %v2244
        %2326 = vmatprep.subr.mxu0 %v2249
        %2327 = vmatpush1.msra.mxu0 %v2248
        %2328 = vmatprep.subr.mxu0 %v2253
        %2329 = vmatpush1.msra.mxu0 %v2252
        %2330 = vmatprep.subr.mxu0 %v2257
        %2331 = vmatpush1.msra.mxu0 %v2256
        %2332 = vmatprep.subr.mxu0 %v2261
        %2333 = vmatpush1.msra.mxu0 %v2260
        %2334 = vmatprep.subr.mxu0 %v2265
        %2335 = vmatpush1.msra.mxu0 %v2264
        %2336 = vmatprep.subr.mxu0 %v2269
        %2337 = vmatpush1.msra.mxu0 %v2268
        %2338 = vmatprep.subr.mxu0 %v2273
        %2339 = vmatpush1.msra.mxu0 %v2272
        %2340 = vmatprep.subr.mxu0 %v2277
        %2341 = vmatpush1.msra.mxu0 %v2276
        %2342 = vmatprep.subr.mxu0 %v2281
        %2343 = vmatpush1.msra.mxu0 %v2280
        %2344 = vmatprep.subr.mxu0 %v2285
        %2345 = vmatpush1.msra.mxu0 %v2284
        %2346 = vmatprep.subr.mxu0 %v2289
        %2347 = vmatpush1.msra.mxu0 %v2288
        %2348 = vmatprep.subr.mxu0 %v2293
        %2349 = vmatpush1.msra.mxu0 %v2292
        %2350 = vmatprep.subr.mxu0 0.0
        %2351 = vmatpush1.msra.mxu0 0.0
        %2352 = vmatprep.subr.mxu0 0.0
        %2353 = vmatpush1.msra.mxu0 0.0
        %2354 = vmatprep.subr.mxu0 0.0
        %2355 = vmatpush1.msra.mxu0 0.0
        %2356 = vmatprep.subr.mxu0 0.0
        %2357 = vmatpush1.msra.mxu0 0.0
        %2358 = vmatprep.subr.mxu0 0.0
        %2359 = vmatpush1.msra.mxu0 0.0
        %2360 = vmatprep.subr.mxu0 0.0
        %2361 = vmatpush1.msra.mxu0 0.0
        %2362 = vmatprep.subr.mxu0 0.0
        %2363 = vmatpush1.msra.mxu0 0.0
        %2364 = vmatprep.subr.mxu0 0.0
        %2365 = vmatpush1.msra.mxu0 0.0
        %2366 = vmatprep.subr.mxu0 0.0
        %2367 = vmatpush1.msra.mxu0 0.0
        %2368 = vmatprep.subr.mxu0 0.0
        %2369 = vmatpush1.msra.mxu0 0.0
        %2370 = vmatprep.subr.mxu0 0.0
        %2371 = vmatpush1.msra.mxu0 0.0
        %2372 = vmatprep.subr.mxu0 0.0
        %2373 = vmatpush1.msra.mxu0 0.0
        %2374 = vmatprep.subr.mxu0 0.0
        %2375 = vmatpush1.msra.mxu0 0.0
        %2376 = vmatprep.subr.mxu0 0.0
        %2377 = vmatpush1.msra.mxu0 0.0
        %2378 = vmatprep.subr.mxu0 0.0
        %2379 = vmatpush1.msra.mxu0 0.0
        %2380 = vmatprep.subr.mxu0 0.0
        %2381 = vmatpush1.msra.mxu0 0.0
        %2382 = vmatprep.mubr.f32.mxu0 0.0
        %2383 = vmatmul.mubr.f32.gmra.mrb[0].mxu0 %v2230
        %v2384 = vpop.f32.mrb[0].mxu0
        %v2385 = vadd.f32 %v2301, %v2384
        %v2386 = vpop.f32.mrb[0].mxu0
        %v2387 = vadd.f32 %v2305, %v2386
        %2388 = vmatprep.mubr.f32.mxu0 0.0
        %2389 = vmatmul.mubr.f32.gmra.mrb[0].mxu0 %v2231
        %v2390 = vpop.f32.mrb[0].mxu0
        %v2391 = vadd.f32 %v2301, %v2390
        %v2392 = vpop.f32.mrb[0].mxu0
        %v2393 = vadd.f32 %v2305, %v2392
        %2394 = vdwg.mxu0
        %2395 = vmatprep.subr.mxu0 %v2235
        %2396 = vmatpush1.msra.mxu0 %v2234
        %2397 = vmatprep.subr.mxu0 %v2239
        %2398 = vmatpush1.msra.mxu0 %v2238
        %2399 = vmatprep.subr.mxu0 %v2243
        %2400 = vmatpush1.msra.mxu0 %v2242
        %2401 = vmatprep.subr.mxu0 %v2247
        %2402 = vmatpush1.msra.mxu0 %v2246
        %2403 = vmatprep.subr.mxu0 %v2251
        %2404 = vmatpush1.msra.mxu0 %v2250
        %2405 = vmatprep.subr.mxu0 %v2255
        %2406 = vmatpush1.msra.mxu0 %v2254
        %2407 = vmatprep.subr.mxu0 %v2259
        %2408 = vmatpush1.msra.mxu0 %v2258
        %2409 = vmatprep.subr.mxu0 %v2263
        %2410 = vmatpush1.msra.mxu0 %v2262
        %2411 = vmatprep.subr.mxu0 %v2267
        %2412 = vmatpush1.msra.mxu0 %v2266
        %2413 = vmatprep.subr.mxu0 %v2271
        %2414 = vmatpush1.msra.mxu0 %v2270
        %2415 = vmatprep.subr.mxu0 %v2275
        %2416 = vmatpush1.msra.mxu0 %v2274
        %2417 = vmatprep.subr.mxu0 %v2279
        %2418 = vmatpush1.msra.mxu0 %v2278
        %2419 = vmatprep.subr.mxu0 %v2283
        %2420 = vmatpush1.msra.mxu0 %v2282
        %2421 = vmatprep.subr.mxu0 %v2287
        %2422 = vmatpush1.msra.mxu0 %v2286
        %2423 = vmatprep.subr.mxu0 %v2291
        %2424 = vmatpush1.msra.mxu0 %v2290
        %2425 = vmatprep.subr.mxu0 %v2295
        %2426 = vmatpush1.msra.mxu0 %v2294
        %2427 = vmatprep.subr.mxu0 0.0
        %2428 = vmatpush1.msra.mxu0 0.0
        %2429 = vmatprep.subr.mxu0 0.0
        %2430 = vmatpush1.msra.mxu0 0.0
        %2431 = vmatprep.subr.mxu0 0.0
        %2432 = vmatpush1.msra.mxu0 0.0
        %2433 = vmatprep.subr.mxu0 0.0
        %2434 = vmatpush1.msra.mxu0 0.0
        %2435 = vmatprep.subr.mxu0 0.0
        %2436 = vmatpush1.msra.mxu0 0.0
        %2437 = vmatprep.subr.mxu0 0.0
        %2438 = vmatpush1.msra.mxu0 0.0
        %2439 = vmatprep.subr.mxu0 0.0
        %2440 = vmatpush1.msra.mxu0 0.0
        %2441 = vmatprep.subr.mxu0 0.0
        %2442 = vmatpush1.msra.mxu0 0.0
        %2443 = vmatprep.subr.mxu0 0.0
        %2444 = vmatpush1.msra.mxu0 0.0
        %2445 = vmatprep.subr.mxu0 0.0
        %2446 = vmatpush1.msra.mxu0 0.0
        %2447 = vmatprep.subr.mxu0 0.0
        %2448 = vmatpush1.msra.mxu0 0.0
        %2449 = vmatprep.subr.mxu0 0.0
        %2450 = vmatpush1.msra.mxu0 0.0
        %2451 = vmatprep.subr.mxu0 0.0
        %2452 = vmatpush1.msra.mxu0 0.0
        %2453 = vmatprep.subr.mxu0 0.0
        %2454 = vmatpush1.msra.mxu0 0.0
        %2455 = vmatprep.subr.mxu0 0.0
        %2456 = vmatpush1.msra.mxu0 0.0
        %2457 = vmatprep.subr.mxu0 0.0
        %2458 = vmatpush1.msra.mxu0 0.0
        %2459 = vmatprep.mubr.f32.mxu0 0.0
        %2460 = vmatmul.mubr.f32.gmra.mrb[0].mxu0 %v2230
        %v2461 = vpop.f32.mrb[0].mxu0
        %v2462 = vadd.f32 %v2309, %v2461
        %v2463 = vpop.f32.mrb[0].mxu0
        %v2464 = vadd.f32 %v2313, %v2463
        %2465 = vmatprep.mubr.f32.mxu0 0.0
        %2466 = vmatmul.mubr.f32.gmra.mrb[0].mxu0 %v2231
        %v2467 = vpop.f32.mrb[0].mxu0
        %v2468 = vadd.f32 %v2309, %v2467
        %v2469 = vpop.f32.mrb[0].mxu0
        %v2470 = vadd.f32 %v2313, %v2469
        %2471 = vdwg.mxu0
        %v2472 = vmax.f32 %v2385, 0.0
        %v2473 = vmax.f32 %v2387, 0.0
        %v2474 = vmax.f32 %v2462, 0.0
        %v2475 = vmax.f32 %v2464, 0.0
        %v2476 = vmax.f32 %v2391, 0.0
        %v2477 = vmax.f32 %v2393, 0.0
        %v2478 = vmax.f32 %v2468, 0.0
        %v2479 = vmax.f32 %v2470, 0.0
        %v2480 = vld [vmem:[#allocation10] sm:$0xff]
        %v2481 = vld [vmem:[#allocation10 + $0x8] sm:$0xff]
        %v2482 = vld [vmem:[#allocation10 + $0x10] sm:$0xff]
        %v2483 = vld [vmem:[#allocation10 + $0x18] sm:$0xff]
        %v2484 = vld [vmem:[#allocation10 + $0x20] sm:$0xff]
        %v2485 = vld [vmem:[#allocation10 + $0x28] sm:$0xff]
        %v2486 = vld [vmem:[#allocation10 + $0x30] sm:$0xff]
        %v2487 = vld [vmem:[#allocation10 + $0x38] sm:$0xff]
        %v2488 = vld [vmem:[#allocation10 + $0x40] sm:$0xff]
        %v2489 = vld [vmem:[#allocation10 + $0x48] sm:$0xff]
        %v2490 = vld [vmem:[#allocation10 + $0x50] sm:$0xff]
        %v2491 = vld [vmem:[#allocation10 + $0x58] sm:$0xff]
        %v2492 = vld [vmem:[#allocation10 + $0x60] sm:$0xff]
        %v2493 = vld [vmem:[#allocation10 + $0x68] sm:$0xff]
        %v2494 = vld [vmem:[#allocation10 + $0x70] sm:$0xff]
        %v2495 = vld [vmem:[#allocation10 + $0x78] sm:$0xff]
        %v2496 = vld [vmem:[#allocation10 + $0x80] sm:$0xff]
        %v2497 = vld [vmem:[#allocation10 + $0x88] sm:$0xff]
        %v2498 = vld [vmem:[#allocation10 + $0x90] sm:$0xff]
        %v2499 = vld [vmem:[#allocation10 + $0x98] sm:$0xff]
        %v2500 = vld [vmem:[#allocation10 + $0xa0] sm:$0xff]
        %v2501 = vld [vmem:[#allocation10 + $0xa8] sm:$0xff]
        %v2502 = vld [vmem:[#allocation10 + $0xb0] sm:$0xff]
        %v2503 = vld [vmem:[#allocation10 + $0xb8] sm:$0xff]
        %v2504 = vld [vmem:[#allocation10 + $0xc0] sm:$0xff]
        %v2505 = vld [vmem:[#allocation10 + $0xc8] sm:$0xff]
        %v2506 = vld [vmem:[#allocation10 + $0xd0] sm:$0xff]
        %v2507 = vld [vmem:[#allocation10 + $0xd8] sm:$0xff]
        %v2508 = vld [vmem:[#allocation10 + $0xe0] sm:$0xff]
        %v2509 = vld [vmem:[#allocation10 + $0xe8] sm:$0xff]
        %v2510 = vld [vmem:[#allocation10 + $0xf0] sm:$0xff]
        %v2511 = vld [vmem:[#allocation10 + $0xf8] sm:$0xff]
        %v2512 = vld [vmem:[#allocation10 + $0x100] sm:$0xff]
        %v2513 = vld [vmem:[#allocation10 + $0x108] sm:$0xff]
        %v2514 = vld [vmem:[#allocation10 + $0x110] sm:$0xff]
        %v2515 = vld [vmem:[#allocation10 + $0x118] sm:$0xff]
        %v2516 = vld [vmem:[#allocation10 + $0x120] sm:$0xff]
        %v2517 = vld [vmem:[#allocation10 + $0x128] sm:$0xff]
        %v2518 = vld [vmem:[#allocation10 + $0x130] sm:$0xff]
        %v2519 = vld [vmem:[#allocation10 + $0x138] sm:$0xff]
        %v2520 = vld [vmem:[#allocation10 + $0x140] sm:$0xff]
        %v2521 = vld [vmem:[#allocation10 + $0x148] sm:$0xff]
        %v2522 = vld [vmem:[#allocation10 + $0x150] sm:$0xff]
        %v2523 = vld [vmem:[#allocation10 + $0x158] sm:$0xff]
        %v2524 = vld [vmem:[#allocation10 + $0x160] sm:$0xff]
        %v2525 = vld [vmem:[#allocation10 + $0x168] sm:$0xff]
        %v2526 = vld [vmem:[#allocation10 + $0x170] sm:$0xff]
        %v2527 = vld [vmem:[#allocation10 + $0x178] sm:$0xff]
        %v2528 = vld [vmem:[#allocation10 + $0x180] sm:$0xff]
        %v2529 = vld [vmem:[#allocation10 + $0x188] sm:$0xff]
        %v2530 = vld [vmem:[#allocation10 + $0x190] sm:$0xff]
        %v2531 = vld [vmem:[#allocation10 + $0x198] sm:$0xff]
        %v2532 = vld [vmem:[#allocation10 + $0x1a0] sm:$0xff]
        %v2533 = vld [vmem:[#allocation10 + $0x1a8] sm:$0xff]
        %v2534 = vld [vmem:[#allocation10 + $0x1b0] sm:$0xff]
        %v2535 = vld [vmem:[#allocation10 + $0x1b8] sm:$0xff]
        %v2536 = vld [vmem:[#allocation10 + $0x1c0] sm:$0xff]
        %v2537 = vld [vmem:[#allocation10 + $0x1c8] sm:$0xff]
        %v2538 = vld [vmem:[#allocation10 + $0x1d0] sm:$0xff]
        %v2539 = vld [vmem:[#allocation10 + $0x1d8] sm:$0xff]
        %v2540 = vld [vmem:[#allocation10 + $0x1e0] sm:$0xff]
        %v2541 = vld [vmem:[#allocation10 + $0x1e8] sm:$0xff]
        %v2542 = vld [vmem:[#allocation10 + $0x1f0] sm:$0xff]
        %v2543 = vld [vmem:[#allocation10 + $0x1f8] sm:$0xff]
        %v2544 = vld [vmem:[%s11] sm:$0x1]
        %v2546 = vlaneseq
        %v2547 = vshrl.u32 %v2546, 7
        %v2548 = vsub.s32 0, %v2547
        %v2549 = vrot.slane %v2544, %v2548
        %2551 = vmatprep.subr.mxu0 0.0
        %2552 = vmatpush1.msra.mxu0 %v2480
        %2553 = vmatprep.subr.mxu0 0.0
        %2554 = vmatpush1.msra.mxu0 %v2481
        %2555 = vmatprep.subr.mxu0 0.0
        %2556 = vmatpush1.msra.mxu0 %v2482
        %2557 = vmatprep.subr.mxu0 0.0
        %2558 = vmatpush1.msra.mxu0 %v2483
        %2559 = vmatprep.subr.mxu0 0.0
        %2560 = vmatpush1.msra.mxu0 %v2484
        %2561 = vmatprep.subr.mxu0 0.0
        %2562 = vmatpush1.msra.mxu0 %v2485
        %2563 = vmatprep.subr.mxu0 0.0
        %2564 = vmatpush1.msra.mxu0 %v2486
        %2565 = vmatprep.subr.mxu0 0.0
        %2566 = vmatpush1.msra.mxu0 %v2487
        %2567 = vmatprep.subr.mxu0 0.0
        %2568 = vmatpush1.msra.mxu0 %v2488
        %2569 = vmatprep.subr.mxu0 0.0
        %2570 = vmatpush1.msra.mxu0 %v2489
        %2571 = vmatprep.subr.mxu0 0.0
        %2572 = vmatpush1.msra.mxu0 %v2490
        %2573 = vmatprep.subr.mxu0 0.0
        %2574 = vmatpush1.msra.mxu0 %v2491
        %2575 = vmatprep.subr.mxu0 0.0
        %2576 = vmatpush1.msra.mxu0 %v2492
        %2577 = vmatprep.subr.mxu0 0.0
        %2578 = vmatpush1.msra.mxu0 %v2493
        %2579 = vmatprep.subr.mxu0 0.0
        %2580 = vmatpush1.msra.mxu0 %v2494
        %2581 = vmatprep.subr.mxu0 0.0
        %2582 = vmatpush1.msra.mxu0 %v2495
        %2583 = vmatprep.subr.mxu0 0.0
        %2584 = vmatpush1.msra.mxu0 %v2496
        %2585 = vmatprep.subr.mxu0 0.0
        %2586 = vmatpush1.msra.mxu0 %v2497
        %2587 = vmatprep.subr.mxu0 0.0
        %2588 = vmatpush1.msra.mxu0 %v2498
        %2589 = vmatprep.subr.mxu0 0.0
        %2590 = vmatpush1.msra.mxu0 %v2499
        %2591 = vmatprep.subr.mxu0 0.0
        %2592 = vmatpush1.msra.mxu0 %v2500
        %2593 = vmatprep.subr.mxu0 0.0
        %2594 = vmatpush1.msra.mxu0 %v2501
        %2595 = vmatprep.subr.mxu0 0.0
        %2596 = vmatpush1.msra.mxu0 %v2502
        %2597 = vmatprep.subr.mxu0 0.0
        %2598 = vmatpush1.msra.mxu0 %v2503
        %2599 = vmatprep.subr.mxu0 0.0
        %2600 = vmatpush1.msra.mxu0 %v2504
        %2601 = vmatprep.subr.mxu0 0.0
        %2602 = vmatpush1.msra.mxu0 %v2505
        %2603 = vmatprep.subr.mxu0 0.0
        %2604 = vmatpush1.msra.mxu0 %v2506
        %2605 = vmatprep.subr.mxu0 0.0
        %2606 = vmatpush1.msra.mxu0 %v2507
        %2607 = vmatprep.subr.mxu0 0.0
        %2608 = vmatpush1.msra.mxu0 %v2508
        %2609 = vmatprep.subr.mxu0 0.0
        %2610 = vmatpush1.msra.mxu0 %v2509
        %2611 = vmatprep.subr.mxu0 0.0
        %2612 = vmatpush1.msra.mxu0 %v2510
        %2613 = vmatprep.subr.mxu0 0.0
        %2614 = vmatpush1.msra.mxu0 %v2511
        %2615 = vmatprep.mubr.f32.mxu0 %v2473
        %2616 = vmatmul.mubr.f32.gmra.mrb[0].mxu0 %v2472
        %v2617 = vpop.f32.mrb[0].mxu0
        %v2618 = vadd.f32 %v2549, %v2617
        %v2619 = vpop.f32.mrb[0].mxu0
        %2620 = vmatprep.mubr.f32.mxu0 %v2477
        %2621 = vmatmul.mubr.f32.gmra.mrb[0].mxu0 %v2476
        %v2622 = vpop.f32.mrb[0].mxu0
        %v2623 = vadd.f32 %v2549, %v2622
        %v2624 = vpop.f32.mrb[0].mxu0
        %2625 = vdwg.mxu0
        %2626 = vmatprep.subr.mxu0 0.0
        %2627 = vmatpush1.msra.mxu0 %v2512
        %2628 = vmatprep.subr.mxu0 0.0
        %2629 = vmatpush1.msra.mxu0 %v2513
        %2630 = vmatprep.subr.mxu0 0.0
        %2631 = vmatpush1.msra.mxu0 %v2514
        %2632 = vmatprep.subr.mxu0 0.0
        %2633 = vmatpush1.msra.mxu0 %v2515
        %2634 = vmatprep.subr.mxu0 0.0
        %2635 = vmatpush1.msra.mxu0 %v2516
        %2636 = vmatprep.subr.mxu0 0.0
        %2637 = vmatpush1.msra.mxu0 %v2517
        %2638 = vmatprep.subr.mxu0 0.0
        %2639 = vmatpush1.msra.mxu0 %v2518
        %2640 = vmatprep.subr.mxu0 0.0
        %2641 = vmatpush1.msra.mxu0 %v2519
        %2642 = vmatprep.subr.mxu0 0.0
        %2643 = vmatpush1.msra.mxu0 %v2520
        %2644 = vmatprep.subr.mxu0 0.0
        %2645 = vmatpush1.msra.mxu0 %v2521
        %2646 = vmatprep.subr.mxu0 0.0
        %2647 = vmatpush1.msra.mxu0 %v2522
        %2648 = vmatprep.subr.mxu0 0.0
        %2649 = vmatpush1.msra.mxu0 %v2523
        %2650 = vmatprep.subr.mxu0 0.0
        %2651 = vmatpush1.msra.mxu0 %v2524
        %2652 = vmatprep.subr.mxu0 0.0
        %2653 = vmatpush1.msra.mxu0 %v2525
        %2654 = vmatprep.subr.mxu0 0.0
        %2655 = vmatpush1.msra.mxu0 %v2526
        %2656 = vmatprep.subr.mxu0 0.0
        %2657 = vmatpush1.msra.mxu0 %v2527
        %2658 = vmatprep.subr.mxu0 0.0
        %2659 = vmatpush1.msra.mxu0 %v2528
        %2660 = vmatprep.subr.mxu0 0.0
        %2661 = vmatpush1.msra.mxu0 %v2529
        %2662 = vmatprep.subr.mxu0 0.0
        %2663 = vmatpush1.msra.mxu0 %v2530
        %2664 = vmatprep.subr.mxu0 0.0
        %2665 = vmatpush1.msra.mxu0 %v2531
        %2666 = vmatprep.subr.mxu0 0.0
        %2667 = vmatpush1.msra.mxu0 %v2532
        %2668 = vmatprep.subr.mxu0 0.0
        %2669 = vmatpush1.msra.mxu0 %v2533
        %2670 = vmatprep.subr.mxu0 0.0
        %2671 = vmatpush1.msra.mxu0 %v2534
        %2672 = vmatprep.subr.mxu0 0.0
        %2673 = vmatpush1.msra.mxu0 %v2535
        %2674 = vmatprep.subr.mxu0 0.0
        %2675 = vmatpush1.msra.mxu0 %v2536
        %2676 = vmatprep.subr.mxu0 0.0
        %2677 = vmatpush1.msra.mxu0 %v2537
        %2678 = vmatprep.subr.mxu0 0.0
        %2679 = vmatpush1.msra.mxu0 %v2538
        %2680 = vmatprep.subr.mxu0 0.0
        %2681 = vmatpush1.msra.mxu0 %v2539
        %2682 = vmatprep.subr.mxu0 0.0
        %2683 = vmatpush1.msra.mxu0 %v2540
        %2684 = vmatprep.subr.mxu0 0.0
        %2685 = vmatpush1.msra.mxu0 %v2541
        %2686 = vmatprep.subr.mxu0 0.0
        %2687 = vmatpush1.msra.mxu0 %v2542
        %2688 = vmatprep.subr.mxu0 0.0
        %2689 = vmatpush1.msra.mxu0 %v2543
        %2690 = vmatprep.mubr.f32.mxu0 %v2475
        %2691 = vmatmul.mubr.f32.gmra.mrb[0].mxu0 %v2474
        %v2692 = vpop.f32.mrb[0].mxu0
        %v2693 = vadd.f32 %v2618, %v2692
        %v2694 = vpop.f32.mrb[0].mxu0
        %2695 = vmatprep.mubr.f32.mxu0 %v2479
        %2696 = vmatmul.mubr.f32.gmra.mrb[0].mxu0 %v2478
        %v2697 = vpop.f32.mrb[0].mxu0
        %v2698 = vadd.f32 %v2623, %v2697
        %v2699 = vpop.f32.mrb[0].mxu0
        %2700 = vdwg.mxu0
        %v2701 = vadd.f32 %v2190, %v2693
        %v2702 = vadd.f32 %v2191, %v2698
        %2703 = vst [vmem:[%s489] sm:$0xff] %v2701
        %2704 = vst [vmem:[%s489 + $0x8] sm:$0xff] %v2702
        %s2705 = sand.u32 %s296, 1
        %s2706 = scalar_lea.sflag [#allocation4], %s2705
        %s2707 = sand.u32 %s296, 1
        %s2708 = smul.addr %s2707, 16
        %s2709 = scalar_lea.vmem [#allocation11], %s2708
        // Predicated region
        $region89: #{tpu_custom_call.1} parent=67 // pred_check
          %p2710 = pneg %p306
        $region90: #{tpu_custom_call.1} parent=67 // pred_check_branch
          %2712 = sbr.rel (%p2710) target = $region92
        $region91: #{tpu_custom_call.1} parent=67 // pred_region
          %s2714 = ssub.s32 256, 256
          %2715 = vsyncadd %s2706, %s2714
          %s2716 = smul.addr %s31, 2
          %s2717 = smul.addr %s2716, 128
          %s2718 = scalar_lea.hbm %s12, %s2717
          %s2719 = sshll.u32 %s2709, 4
          %s2720 = int_to_ptr.vmem [resolvable:$true] %s2719
          %2725 = dma.vmem_to_hbm [thread:$0]  %s2720, 256, %s2718, %s2706, 128, 128, 8
        $region92: #{tpu_custom_call.1} parent=67 // pred_fallthru
          _
      $region68: #{tpu_custom_call.1} parent=5 // pred_fallthru
        _
      %p2726 = scmp.le.s32.totalorder 2, %s26
      // Predicated region
      $region93: #{tpu_custom_call.1} parent=5 // pred_check
        %p2727 = pneg %p2726
      $region94: #{tpu_custom_call.1} parent=5 // pred_check_branch
        %2729 = sbr.rel (%p2727) target = $region96
      $region95: #{tpu_custom_call.1} parent=5 // pred_region
        %s2730 = ssub.s32 %s26, 2
        // Predicated region
        $region97: #{tpu_custom_call.1} parent=95 // pred_check
          %p2731 = pneg %p312
        $region98: #{tpu_custom_call.1} parent=95 // pred_check_branch
          %2733 = sbr.rel (%p2731) target = $region100
        $region99: #{tpu_custom_call.1} parent=95 // pred_region
          %s2734 = sand.u32 %s297, 1
          %s2735 = scalar_lea.sflag [#allocation4], %s2734
          %s2736 = sand.u32 %s297, 1
          %s2737 = smul.addr %s2736, 16
          %s2738 = scalar_lea.vmem [#allocation11], %s2737
          %2739 = dma.done %s2735, 256
        $region100: #{tpu_custom_call.1} parent=95 // pred_fallthru
          _
      $region96: #{tpu_custom_call.1} parent=5 // pred_fallthru
        _
    $region6: #{tpu_custom_call.1} parent=1 // loop_footer
      %s30 = sadd.s32 1, %s26
    $region7: #{tpu_custom_call.1} parent=1 // loop_footer_branch
      %25 = sbr.rel target = $region3
    $region8: #{tpu_custom_call.1} parent=1 // loop_exit
      _
    %2740 = vsyncpa [#allocation3], 1
    %s2741 = scalar_lea.sflag [#allocation3], 1
    %2742 = vsyncpa %s2741, 1
    %2743 = vsyncpa [#allocation6], 1
    %2744 = vsyncpa [#allocation9], 1
    %2745 = vsyncpa [#allocation4], 1
    %s2746 = scalar_lea.sflag [#allocation4], 1
    %2747 = vsyncpa %s2746, 1

</llo_original>
